<compile_context>
chip_gen: v7x
topology: tpu7x:2x2x1
jax: 0.10.0
libtpu: 0.0.40
codegen_flags: <defaults>
</compile_context>

<pallas_src>
import jax
import jax.numpy as jnp
from jax.experimental import pallas as pl
from jax.experimental.pallas import tpu as pltpu

_SQRT_HALF = 0.7071067811865476
_TM_CANDIDATES = (1024, 768, 512, 384, 256, 192, 128, 64, 32, 16, 8)
_TJ_CANDIDATES = (2048, 1536, 1024, 768, 512, 384, 256, 128)


def _cdiv(a, b):
    return -(-a // b)


def _round_up(a, m):
    return _cdiv(a, m) * m


def _gelu_exact(h):
    # Exact (erf-based) GELU in f32 -- matches torch.nn.GELU() default.
    return 0.5 * h * (1.0 + jax.lax.erf(h * _SQRT_HALF))


def _dot(a, b):
    # Native-dtype operands on the MXU; f32 accumulation. For f32 operands force
    # full precision so the fused kernel matches an f32 reference.
    prec = jax.lax.Precision.HIGHEST if a.dtype == jnp.float32 else None
    return jnp.dot(a, b, preferred_element_type=jnp.float32, precision=prec)


# ---------------------------------------------------------------------------
# Kernels
# ---------------------------------------------------------------------------
def _ffn_resident_kernel(x_ref, w1_ref, b1_ref, w2_ref, b2_ref, o_ref):
    # Full W1/W2 resident in VMEM; one row block per grid step.
    h = _dot(x_ref[...], w1_ref[...])
    h = _gelu_exact(h + b1_ref[...].astype(jnp.float32))
    y = _dot(h.astype(w2_ref.dtype), w2_ref[...])
    o_ref[...] = (y + b2_ref[...].astype(jnp.float32)).astype(o_ref.dtype)


def _ffn_tiled_kernel(x_ref, w1_ref, b1_ref, w2_ref, b2_ref, o_ref, acc_ref):
    # d_intermediate tiled along grid axis 1; f32 VMEM accumulator across j.
    j = pl.program_id(1)

    h = _dot(x_ref[...], w1_ref[...])
    h = _gelu_exact(h + b1_ref[...].astype(jnp.float32))
    partial = _dot(h.astype(w2_ref.dtype), w2_ref[...])

    @pl.when(j == 0)
    def _():
        acc_ref[...] = partial          # write-direct: no zero-init RMW

    @pl.when(j > 0)
    def _():
        acc_ref[...] += partial

    @pl.when(j == pl.num_programs(1) - 1)
    def _():
        o_ref[...] = (acc_ref[...]
                      + b2_ref[...].astype(jnp.float32)).astype(o_ref.dtype)


# ---------------------------------------------------------------------------
# Tile selection / VMEM budgeting
# ---------------------------------------------------------------------------
def _vmem_capacity_bytes():
    try:
        cap = getattr(pltpu.get_tpu_info(), "vmem_capacity_bytes", None)
        if cap:
            return int(cap)
    except Exception:
        pass
    return 64 * 1024 * 1024  # conservative: v7x per-core VMEM


def _resident_vmem_bytes(tm, d_emb, d_int, xb, wb, ob):
    weights = 2 * 2 * d_emb * d_int * wb          # W1+W2 (double-buffer alloc)
    io = 2 * tm * d_emb * (xb + ob)               # x / out blocks, double-buffered
    interm = tm * d_int * 4                       # f32 hidden activation
    biases = 2 * (d_int + d_emb) * 4
    return weights + io + interm + biases


def _tiled_vmem_bytes(tm, tj, d_emb, d_int, xb, wb, ob):
    weights = 2 * 2 * d_emb * tj * wb             # W1/W2 slabs, double-buffered
    io = 2 * tm * d_emb * (xb + ob)
    acc = tm * d_emb * 4
    interm = tm * tj * 4
    biases = 2 * (tj + d_emb) * 4
    return weights + io + acc + interm + biases


def _choose_config(M, d_emb, d_int, xb, wb, ob, budget):
    m_cap = _round_up(M, 8)
    tm_cands = sorted({min(t, m_cap) for t in _TM_CANDIDATES}, reverse=True)

    # Path A: keep both weight matrices resident in VMEM (weights DMA'd once).
    for tm in tm_cands:
        if _resident_vmem_bytes(tm, d_emb, d_int, xb, wb, ob) <= budget:
            # Resident weights make smaller row blocks cheap; give both v7x
            # TensorCores work by ensuring >= 2 blocks on the parallel axis.
            if M > 8:
                tm = min(tm, max(8, _round_up(_cdiv(M, 2), 8)))
            return True, tm, d_int

    # Path B: stream d_intermediate slabs, accumulate in f32 VMEM.
    tj_opts = [t for t in _TJ_CANDIDATES if t <= d_int and d_int % t == 0] or [d_int]
    for tm in tm_cands:
        for tj in tj_opts:
            if _tiled_vmem_bytes(tm, tj, d_emb, d_int, xb, wb, ob) <= budget:
                return False, tm, tj
    return False, 8, tj_opts[-1]  # last resort


# ---------------------------------------------------------------------------
# Wrapper
# ---------------------------------------------------------------------------
def feed_forward(x, w1, b1, w2, b2, *, max_vmem_bytes=None):
    """y = GELU(x @ w1 + b1) @ w2 + b2.

    x: (..., d_embedding); w1: (d_embedding, d_intermediate); b1: (d_intermediate,);
    w2: (d_intermediate, d_embedding); b2: (d_embedding,).
    """
    d_emb, d_int = w1.shape
    assert w2.shape == (d_int, d_emb)
    assert b1.shape == (d_int,) and b2.shape == (d_emb,)

    orig_shape = x.shape
    x2 = x.reshape(-1, d_emb)
    M = x2.shape[0]

    xb = jnp.dtype(x.dtype).itemsize
    wb = jnp.dtype(w1.dtype).itemsize
    ob = xb

    capacity = _vmem_capacity_bytes()
    vmem_limit = min(int(0.80 * capacity), 100 * 1024 * 1024)
    budget = max_vmem_bytes if max_vmem_bytes is not None else int(0.85 * vmem_limit)

    resident, tm, tj = _choose_config(M, d_emb, d_int, xb, wb, ob, budget)

    # Pad rows to a multiple of tm (padded rows are sliced off afterwards).
    M_pad = _round_up(M, tm)
    if M_pad != M:
        x2 = jnp.pad(x2, ((0, M_pad - M), (0, 0)))
    n_row_blocks = M_pad // tm

    b1_2d = b1.reshape(1, d_int)
    b2_2d = b2.reshape(1, d_emb)

    # Advisory cost estimate so XLA schedules around this call sensibly.
    w_passes = 1 if resident else n_row_blocks
    cost = pl.CostEstimate(
        flops=int(4 * M_pad * d_emb * d_int),
        transcendentals=int(M_pad * d_int),
        bytes_accessed=int(M_pad * d_emb * (xb + ob)
                           + w_passes * 2 * d_emb * d_int * wb
                           + (d_int + d_emb) * 4),
    )
    cparams = pltpu.CompilerParams(
        dimension_semantics=("parallel",) if resident else ("parallel", "arbitrary"),
        vmem_limit_bytes=int(vmem_limit),
    )

    if resident:
        out = pl.pallas_call(
            _ffn_resident_kernel,
            out_shape=jax.ShapeDtypeStruct((M_pad, d_emb), x.dtype),
            grid_spec=pltpu.PrefetchScalarGridSpec(
                num_scalar_prefetch=0,
                grid=(n_row_blocks,),
                in_specs=[
                    pl.BlockSpec((tm, d_emb), lambda i: (i, 0)),
                    pl.BlockSpec((d_emb, d_int), lambda i: (0, 0)),
                    pl.BlockSpec((1, d_int), lambda i: (0, 0)),
                    pl.BlockSpec((d_int, d_emb), lambda i: (0, 0)),
                    pl.BlockSpec((1, d_emb), lambda i: (0, 0)),
                ],
                out_specs=pl.BlockSpec((tm, d_emb), lambda i: (i, 0)),
            ),
            compiler_params=cparams,
            cost_estimate=cost,
        )(x2, w1, b1_2d, w2, b2_2d)
    else:
        out = pl.pallas_call(
            _ffn_tiled_kernel,
            out_shape=jax.ShapeDtypeStruct((M_pad, d_emb), x.dtype),
            grid_spec=pltpu.PrefetchScalarGridSpec(
                num_scalar_prefetch=0,
                grid=(n_row_blocks, d_int // tj),
                in_specs=[
                    pl.BlockSpec((tm, d_emb), lambda i, j: (i, 0)),
                    pl.BlockSpec((d_emb, tj), lambda i, j: (0, j)),
                    pl.BlockSpec((1, tj), lambda i, j: (0, j)),
                    pl.BlockSpec((tj, d_emb), lambda i, j: (j, 0)),
                    pl.BlockSpec((1, d_emb), lambda i, j: (0, 0)),
                ],
                out_specs=pl.BlockSpec((tm, d_emb), lambda i, j: (i, 0)),
                scratch_shapes=[pltpu.VMEM((tm, d_emb), jnp.float32)],
            ),
            compiler_params=cparams,
            cost_estimate=cost,
        )(x2, w1, b1_2d, w2, b2_2d)

    if M_pad != M:
        out = out[:M]
    return out.reshape(orig_shape[:-1] + (d_emb,))


def _reference(x, w1, b1, w2, b2):
    prec = jax.lax.Precision.HIGHEST if x.dtype == jnp.float32 else None
    h = jnp.dot(x, w1, precision=prec) + b1
    h = jax.nn.gelu(h, approximate=False)
    return jnp.dot(h, w2, precision=prec) + b2


if __name__ == "__main__":
    # cfg = {'d_embedding': 32, 'd_intermediate': 128}; batch=2, seq=8
    B, T = 2, 8
    d_embedding, d_intermediate = 32, 128

    key = jax.random.PRNGKey(0)
    k1, k2, k3, k4, k5, k6, k7, k8, k9 = jax.random.split(key, 9)
    x = jax.random.normal(k1, (B, T, d_embedding), dtype=jnp.float32)
    # Weights stored (in, out), i.e. transposed vs torch.nn.Linear.weight.
    w1 = jax.random.normal(k2, (d_embedding, d_intermediate), jnp.float32) * 0.05
    b1 = jax.random.normal(k3, (d_intermediate,), jnp.float32) * 0.05
    w2 = jax.random.normal(k4, (d_intermediate, d_embedding), jnp.float32) * 0.05
    b2 = jax.random.normal(k5, (d_embedding,), jnp.float32) * 0.05

    # Path A (resident weights), f32.
    out = jax.block_until_ready(feed_forward(x, w1, b1, w2, b2))
    ref = _reference(x, w1, b1, w2, b2)
    assert out.shape == (B, T, d_embedding)
    assert jnp.allclose(out, ref, atol=1e-4, rtol=1e-4), "f32 resident path mismatch"

    # Path B (tiled d_intermediate reduction + row padding), forced via a tiny
    # VMEM budget; d_int=256 gives two j slabs, M=20 rows is padded to 24.
    d_int_b = 256
    w1b = jax.random.normal(k6, (d_embedding, d_int_b), jnp.float32) * 0.05
    b1b = jax.random.normal(k7, (d_int_b,), jnp.float32) * 0.05
    w2b = jax.random.normal(k8, (d_int_b, d_embedding), jnp.float32) * 0.05
    b2b = jax.random.normal(k9, (d_embedding,), jnp.float32) * 0.05
    xb_in = jax.random.normal(k1, (4, 5, d_embedding), dtype=jnp.float32)
    out_b = jax.block_until_ready(
        feed_forward(xb_in, w1b, b1b, w2b, b2b, max_vmem_bytes=100_000))
    ref_b = _reference(xb_in, w1b, b1b, w2b, b2b)
    assert out_b.shape == (4, 5, d_embedding)
    assert jnp.allclose(out_b, ref_b, atol=1e-4, rtol=1e-4), "tiled path mismatch"

    # bf16 path (covers the narrow-operand MXU cast) with loose tolerance.
    out_bf = jax.block_until_ready(
        feed_forward(x.astype(jnp.bfloat16), w1.astype(jnp.bfloat16),
                     b1.astype(jnp.bfloat16), w2.astype(jnp.bfloat16),
                     b2.astype(jnp.bfloat16)))
    assert jnp.allclose(out_bf.astype(jnp.float32), ref, atol=3e-2, rtol=3e-2), \
        "bf16 path mismatch"

    print("KERNEL_OK")
</pallas_src>

<mosaic_0001>
module attributes {stable_mosaic.version = 11 : i64} {
  func.func @_ffn_resident_kernel(%arg0: i32, %arg1: memref<8x32xf32, #tpu.memory_space<vmem>>, %arg2: memref<32x128xf32, #tpu.memory_space<vmem>>, %arg3: memref<1x128xf32, #tpu.memory_space<vmem>>, %arg4: memref<128x32xf32, #tpu.memory_space<vmem>>, %arg5: memref<1x32xf32, #tpu.memory_space<vmem>>, %arg6: memref<8x32xf32, #tpu.memory_space<vmem>>) attributes {dimension_semantics = [#tpu.dimension_semantics<parallel>], iteration_bounds = array<i64: 2>, scalar_prefetch = 0 : i64, scratch_operands = 0 : i64, tpu.core_type = #tpu.core_type<tc>, window_params = [{transform_indices = @transform_0, window_bounds = array<i64: 8, 32>}, {pipeline_mode = #tpu.pipeline_mode<synchronous>, transform_indices = @transform_1, window_bounds = array<i64: 32, 128>}, {pipeline_mode = #tpu.pipeline_mode<synchronous>, transform_indices = @transform_2, window_bounds = array<i64: 1, 128>}, {pipeline_mode = #tpu.pipeline_mode<synchronous>, transform_indices = @transform_3, window_bounds = array<i64: 128, 32>}, {pipeline_mode = #tpu.pipeline_mode<synchronous>, transform_indices = @transform_4, window_bounds = array<i64: 1, 32>}, {transform_indices = @transform_5, window_bounds = array<i64: 8, 32>}]} {
    %c0 = arith.constant 0 : index
    %c0_0 = arith.constant 0 : index
    %0 = vector.load %arg1[%c0, %c0_0] : memref<8x32xf32, #tpu.memory_space<vmem>>, vector<8x32xf32>
    %c0_1 = arith.constant 0 : index
    %c0_2 = arith.constant 0 : index
    %1 = vector.load %arg2[%c0_1, %c0_2] : memref<32x128xf32, #tpu.memory_space<vmem>>, vector<32x128xf32>
    %cst = arith.constant dense<0.000000e+00> : vector<8x128xf32>
    %2 = tpu.matmul %0, %1, %cst {dimension_numbers = #tpu.dot_dimension_numbers<[1], [0], [0], [1], [0, 0, 1, 1], [], []>, precision = #tpu.contract_precision<fp32>} : vector<8x32xf32>, vector<32x128xf32>, vector<8x128xf32> -> vector<8x128xf32>
    %c0_3 = arith.constant 0 : index
    %c0_4 = arith.constant 0 : index
    %3 = vector.load %arg3[%c0_3, %c0_4] : memref<1x128xf32, #tpu.memory_space<vmem>>, vector<1x128xf32>
    %4 = vector.broadcast %3 : vector<1x128xf32> to vector<8x128xf32>
    %5 = arith.addf %2, %4 : vector<8x128xf32>
    %cst_5 = arith.constant 5.000000e-01 : f32
    %6 = vector.broadcast %cst_5 : f32 to vector<8x128xf32>
    %7 = arith.mulf %6, %5 : vector<8x128xf32>
    %cst_6 = arith.constant 0.707106769 : f32
    %8 = vector.broadcast %cst_6 : f32 to vector<8x128xf32>
    %9 = arith.mulf %5, %8 : vector<8x128xf32>
    %10 = math.erf %9 : vector<8x128xf32>
    %cst_7 = arith.constant 1.000000e+00 : f32
    %11 = vector.broadcast %cst_7 : f32 to vector<8x128xf32>
    %12 = arith.addf %11, %10 : vector<8x128xf32>
    %13 = arith.mulf %7, %12 : vector<8x128xf32>
    %c0_8 = arith.constant 0 : index
    %c0_9 = arith.constant 0 : index
    %14 = vector.load %arg4[%c0_8, %c0_9] : memref<128x32xf32, #tpu.memory_space<vmem>>, vector<128x32xf32>
    %cst_10 = arith.constant dense<0.000000e+00> : vector<8x32xf32>
    %15 = tpu.matmul %13, %14, %cst_10 {dimension_numbers = #tpu.dot_dimension_numbers<[1], [0], [0], [1], [0, 0, 1, 1], [], []>, precision = #tpu.contract_precision<fp32>} : vector<8x128xf32>, vector<128x32xf32>, vector<8x32xf32> -> vector<8x32xf32>
    %c0_11 = arith.constant 0 : index
    %c0_12 = arith.constant 0 : index
    %16 = vector.load %arg5[%c0_11, %c0_12] : memref<1x32xf32, #tpu.memory_space<vmem>>, vector<1x32xf32>
    %17 = vector.broadcast %16 : vector<1x32xf32> to vector<8x32xf32>
    %18 = arith.addf %15, %17 : vector<8x32xf32>
    %c0_13 = arith.constant 0 : index
    %c0_14 = arith.constant 0 : index
    %19 = vector.load %arg6[%c0_13, %c0_14] : memref<8x32xf32, #tpu.memory_space<vmem>>, vector<8x32xf32>
    tpu.vector_store %arg6[%c0_13, %c0_14], %18 {strides = array<i32>} : memref<8x32xf32, #tpu.memory_space<vmem>>, vector<8x32xf32>,
    return
  }
  func.func @transform_0(%arg0: i32) -> (i32, i32) {
    %c0_i32 = arith.constant 0 : i32
    %c0_i32_0 = arith.constant 0 : i32
    return %arg0, %c0_i32 : i32, i32
  }
  func.func @transform_1(%arg0: i32) -> (i32, i32) {
    %c0_i32 = arith.constant 0 : i32
    %c0_i32_0 = arith.constant 0 : i32
    %c0_i32_1 = arith.constant 0 : i32
    return %c0_i32, %c0_i32_0 : i32, i32
  }
  func.func @transform_2(%arg0: i32) -> (i32, i32) {
    %c0_i32 = arith.constant 0 : i32
    %c0_i32_0 = arith.constant 0 : i32
    %c0_i32_1 = arith.constant 0 : i32
    return %c0_i32, %c0_i32_0 : i32, i32
  }
  func.func @transform_3(%arg0: i32) -> (i32, i32) {
    %c0_i32 = arith.constant 0 : i32
    %c0_i32_0 = arith.constant 0 : i32
    %c0_i32_1 = arith.constant 0 : i32
    return %c0_i32, %c0_i32_0 : i32, i32
  }
  func.func @transform_4(%arg0: i32) -> (i32, i32) {
    %c0_i32 = arith.constant 0 : i32
    %c0_i32_0 = arith.constant 0 : i32
    %c0_i32_1 = arith.constant 0 : i32
    return %c0_i32, %c0_i32_0 : i32, i32
  }
  func.func @transform_5(%arg0: i32) -> (i32, i32) {
    %c0_i32 = arith.constant 0 : i32
    %c0_i32_0 = arith.constant 0 : i32
    return %arg0, %c0_i32 : i32, i32
  }
}

</mosaic_0001>

<llo_original>
// kernel: tpu_custom_call.1
$region0: #{tpu_custom_call.1}
  #allocation0 [shape = 'u32[]', space=smem, size = 0x4, offset = 0x4, fixed_abs, tag = 'smem constant byte address 0x4 - core index']
  #allocation1 [shape = 'u32[144,128]{1,0:T(1,128)}', space=vmem, size = 0x12000, scoped, tag = 'internal scratch']
  %s0 = inlined_call_operand.vmem [shape: f32[16,32], index: 0, kind: input, shape index: {}]
  %s1 = inlined_call_operand.vmem [shape: f32[32,128], index: 1, kind: input, shape index: {}]
  %s2 = inlined_call_operand.vmem [shape: f32[1,128], index: 2, kind: input, shape index: {}]
  %s3 = inlined_call_operand.vmem [shape: f32[128,32], index: 3, kind: input, shape index: {}]
  %s4 = inlined_call_operand.vmem [shape: f32[1,32], index: 4, kind: input, shape index: {}]
  %s5 = inlined_call_operand.hbm [shape: f32[16,32], index: 5, kind: output, shape index: {}]
  %s6 = sld [smem:[#allocation0]]
  $region53: #{tpu_custom_call.1} parent=0
    _
  %s8 = ssub.s32 1, %s6
  %s9 = scalar_select 0, %s8, %s6
  $region1: #{tpu_custom_call.1} parent=0
    #allocation2 [shape = 'u8[8192]{0}', space=vmem, size = 0x2000, scoped, tag = 'output window, operand 0']
    #allocation3 [shape = 's32[2]{0}', space=sflag, size = 0x8, scoped, tag = 'scoped memory for tpu_custom_call.1']
    %10 = vsyncpa [#allocation3], 0
    %s11 = scalar_lea.sflag [#allocation3], 1
    %12 = vsyncpa %s11, 0
    loop: start=0, step=1, limit=4
    $region2: #{tpu_custom_call.1} parent=1 // loop_pre_header
      _
    $region3: #{tpu_custom_call.1} parent=1 // loop_header
      %s14 = sphi 0, %s18
      %p15 = scmp.ge.s32.totalorder %s14, 4
      %s24 = sphi 0, %s26
      %s27 = sphi 0, %s24
      %s28 = sphi 0, %s27
      %s44 = sphi 0, %s28
      %s48 = sphi 0, %s48
      %s50 = sphi 0, %s48
      %s51 = sphi 0, %s50
      %s65 = sphi 0, %s51
      %s69 = sphi 0, %s69
      %s71 = sphi 0, %s69
      %s72 = sphi 0, %s71
      %s86 = sphi 0, %s72
      %s90 = sphi 0, %s90
      %s92 = sphi 0, %s90
      %s93 = sphi 0, %s92
      %s107 = sphi 0, %s93
      %s111 = sphi 0, %s111
      %s113 = sphi 0, %s111
      %s114 = sphi 0, %s113
      %s128 = sphi 0, %s114
      %s134 = sphi 0, %s136
      %s137 = sphi 0, %s134
      %s138 = sphi 0, %s137
      %s154 = sphi 0, %s138
    $region4: #{tpu_custom_call.1} parent=1 // loop_header_branch
      %17 = sbr.rel (%p15) target = $region8
    $region5: #{tpu_custom_call.1} parent=1 // loop_body
      %s19 = ssub.s32 %s14, 1
      %s20 = ssub.s32 %s14, 2
      %s21 = sadd.s32 %s14, 1
      %s22 = ssub.s32 %s14, %s21
      %p23 = scmp.eq.s32.totalorder %s22, 0
      %s25 = sadd.s32 %s24, 1
      %s26 = scalar_select %p23, %s24, %s25
      %p29 = pneg %p23
      %p30 = scmp.eq.s32.totalorder %s14, 1
      %p31 = por %p29, %p30
      %p32 = scmp.ne.s32.totalorder %s24, %s27
      %p33 = scmp.eq.s32.totalorder %s14, 0
      %p34 = por %p32, %p33
      %p35 = scmp.ne.s32.totalorder %s24, %s27
      %p36 = scmp.eq.s32.totalorder %s19, 1
      %p37 = por %p35, %p36
      %p38 = scmp.ne.s32.totalorder %s27, %s28
      %p39 = scmp.eq.s32.totalorder %s19, 0
      %p40 = por %p38, %p39
      %p41 = scmp.ne.s32.totalorder %s27, %s28
      %p42 = scmp.eq.s32.totalorder %s20, 1
      %p43 = por %p41, %p42
      %p45 = scmp.ne.s32.totalorder %s28, %s44
      %p46 = scmp.eq.s32.totalorder %s20, 0
      %p47 = por %p45, %p46
      %s49 = sadd.s32 %s48, 1
      %p52 = scmp.eq.s32.totalorder %s14, 1
      %p53 = scmp.ne.s32.totalorder %s48, %s50
      %p54 = scmp.eq.s32.totalorder %s14, 0
      %p55 = por %p53, %p54
      %p56 = scmp.ne.s32.totalorder %s48, %s50
      %p57 = scmp.eq.s32.totalorder %s19, 1
      %p58 = por %p56, %p57
      %p59 = scmp.ne.s32.totalorder %s50, %s51
      %p60 = scmp.eq.s32.totalorder %s19, 0
      %p61 = por %p59, %p60
      %p62 = scmp.ne.s32.totalorder %s50, %s51
      %p63 = scmp.eq.s32.totalorder %s20, 1
      %p64 = por %p62, %p63
      %p66 = scmp.ne.s32.totalorder %s51, %s65
      %p67 = scmp.eq.s32.totalorder %s20, 0
      %p68 = por %p66, %p67
      %s70 = sadd.s32 %s69, 1
      %p73 = scmp.eq.s32.totalorder %s14, 1
      %p74 = scmp.ne.s32.totalorder %s69, %s71
      %p75 = scmp.eq.s32.totalorder %s14, 0
      %p76 = por %p74, %p75
      %p77 = scmp.ne.s32.totalorder %s69, %s71
      %p78 = scmp.eq.s32.totalorder %s19, 1
      %p79 = por %p77, %p78
      %p80 = scmp.ne.s32.totalorder %s71, %s72
      %p81 = scmp.eq.s32.totalorder %s19, 0
      %p82 = por %p80, %p81
      %p83 = scmp.ne.s32.totalorder %s71, %s72
      %p84 = scmp.eq.s32.totalorder %s20, 1
      %p85 = por %p83, %p84
      %p87 = scmp.ne.s32.totalorder %s72, %s86
      %p88 = scmp.eq.s32.totalorder %s20, 0
      %p89 = por %p87, %p88
      %s91 = sadd.s32 %s90, 1
      %p94 = scmp.eq.s32.totalorder %s14, 1
      %p95 = scmp.ne.s32.totalorder %s90, %s92
      %p96 = scmp.eq.s32.totalorder %s14, 0
      %p97 = por %p95, %p96
      %p98 = scmp.ne.s32.totalorder %s90, %s92
      %p99 = scmp.eq.s32.totalorder %s19, 1
      %p100 = por %p98, %p99
      %p101 = scmp.ne.s32.totalorder %s92, %s93
      %p102 = scmp.eq.s32.totalorder %s19, 0
      %p103 = por %p101, %p102
      %p104 = scmp.ne.s32.totalorder %s92, %s93
      %p105 = scmp.eq.s32.totalorder %s20, 1
      %p106 = por %p104, %p105
      %p108 = scmp.ne.s32.totalorder %s93, %s107
      %p109 = scmp.eq.s32.totalorder %s20, 0
      %p110 = por %p108, %p109
      %s112 = sadd.s32 %s111, 1
      %p115 = scmp.eq.s32.totalorder %s14, 1
      %p116 = scmp.ne.s32.totalorder %s111, %s113
      %p117 = scmp.eq.s32.totalorder %s14, 0
      %p118 = por %p116, %p117
      %p119 = scmp.ne.s32.totalorder %s111, %s113
      %p120 = scmp.eq.s32.totalorder %s19, 1
      %p121 = por %p119, %p120
      %p122 = scmp.ne.s32.totalorder %s113, %s114
      %p123 = scmp.eq.s32.totalorder %s19, 0
      %p124 = por %p122, %p123
      %p125 = scmp.ne.s32.totalorder %s113, %s114
      %p126 = scmp.eq.s32.totalorder %s20, 1
      %p127 = por %p125, %p126
      %p129 = scmp.ne.s32.totalorder %s114, %s128
      %p130 = scmp.eq.s32.totalorder %s20, 0
      %p131 = por %p129, %p130
      %s132 = ssub.s32 %s14, %s21
      %p133 = scmp.eq.s32.totalorder %s132, 0
      %s135 = sadd.s32 %s134, 1
      %s136 = scalar_select %p133, %s134, %s135
      %p139 = pneg %p133
      %p140 = scmp.eq.s32.totalorder %s14, 1
      %p141 = por %p139, %p140
      %p142 = scmp.ne.s32.totalorder %s134, %s137
      %p143 = scmp.eq.s32.totalorder %s14, 0
      %p144 = por %p142, %p143
      %p145 = scmp.ne.s32.totalorder %s134, %s137
      %p146 = scmp.eq.s32.totalorder %s19, 1
      %p147 = por %p145, %p146
      %p148 = scmp.ne.s32.totalorder %s137, %s138
      %p149 = scmp.eq.s32.totalorder %s19, 0
      %p150 = por %p148, %p149
      %p151 = scmp.ne.s32.totalorder %s137, %s138
      %p152 = scmp.eq.s32.totalorder %s20, 1
      %p153 = por %p151, %p152
      %p155 = scmp.ne.s32.totalorder %s138, %s154
      %p156 = scmp.eq.s32.totalorder %s20, 0
      %p157 = por %p155, %p156
      %p158 = scmp.le.s32.totalorder 1, %s14
      %p159 = scmp.lt.s32.totalorder %s14, 3
      %p160 = pnand %p158, %p159
      %p161 = pneg %p160
      // Predicated region
      $region9: #{tpu_custom_call.1} parent=5 // pred_check
        _
      $region10: #{tpu_custom_call.1} parent=5 // pred_check_branch
        %163 = sbr.rel (%p160) target = $region12
      $region11: #{tpu_custom_call.1} parent=5 // pred_region
        %s164 = ssub.s32 %s14, 1
        // Predicated region
        $region13: #{tpu_custom_call.1} parent=11 // pred_check
          %p165 = pneg %p61
        $region14: #{tpu_custom_call.1} parent=11 // pred_check_branch
          %167 = sbr.rel (%p165) target = $region16
        $region15: #{tpu_custom_call.1} parent=11 // pred_region
          _
        $region16: #{tpu_custom_call.1} parent=11 // pred_fallthru
          _
        // Predicated region
        $region17: #{tpu_custom_call.1} parent=11 // pred_check
          %p168 = pneg %p82
        $region18: #{tpu_custom_call.1} parent=11 // pred_check_branch
          %170 = sbr.rel (%p168) target = $region20
        $region19: #{tpu_custom_call.1} parent=11 // pred_region
          _
        $region20: #{tpu_custom_call.1} parent=11 // pred_fallthru
          _
        // Predicated region
        $region21: #{tpu_custom_call.1} parent=11 // pred_check
          %p171 = pneg %p103
        $region22: #{tpu_custom_call.1} parent=11 // pred_check_branch
          %173 = sbr.rel (%p171) target = $region24
        $region23: #{tpu_custom_call.1} parent=11 // pred_region
          _
        $region24: #{tpu_custom_call.1} parent=11 // pred_fallthru
          _
        // Predicated region
        $region25: #{tpu_custom_call.1} parent=11 // pred_check
          %p174 = pneg %p124
        $region26: #{tpu_custom_call.1} parent=11 // pred_check_branch
          %176 = sbr.rel (%p174) target = $region28
        $region27: #{tpu_custom_call.1} parent=11 // pred_region
          _
        $region28: #{tpu_custom_call.1} parent=11 // pred_fallthru
          _
      $region12: #{tpu_custom_call.1} parent=5 // pred_fallthru
        _
      %p177 = scmp.lt.s32.totalorder %s14, 2
      // Predicated region
      $region29: #{tpu_custom_call.1} parent=5 // pred_check
        %p178 = pneg %p177
      $region30: #{tpu_custom_call.1} parent=5 // pred_check_branch
        %180 = sbr.rel (%p178) target = $region32
      $region31: #{tpu_custom_call.1} parent=5 // pred_region
        // Predicated region
        $region33: #{tpu_custom_call.1} parent=31 // pred_check
          %p181 = pneg %p34
        $region34: #{tpu_custom_call.1} parent=31 // pred_check_branch
          %183 = sbr.rel (%p181) target = $region36
        $region35: #{tpu_custom_call.1} parent=31 // pred_region
          %p184 = scmp.lt.s32.totalorder %s14, 1
          %s185 = scalar_select %p184, %s14, 1
          %s186 = smul.addr %s185, 8
          %s187 = scalar_lea.vmem %s0, %s186
        $region36: #{tpu_custom_call.1} parent=31 // pred_fallthru
          _
      $region32: #{tpu_custom_call.1} parent=5 // pred_fallthru
        _
      %p188 = scmp.le.s32.totalorder 1, %s14
      %p189 = scmp.lt.s32.totalorder %s14, 3
      %p190 = pnand %p188, %p189
      %p191 = pneg %p190
      // Predicated region
      $region37: #{tpu_custom_call.1} parent=5 // pred_check
        _
      $region38: #{tpu_custom_call.1} parent=5 // pred_check_branch
        %193 = sbr.rel (%p190) target = $region40
      $region39: #{tpu_custom_call.1} parent=5 // pred_region
        %s194 = ssub.s32 %s14, 1
        %p195 = scmp.lt.s32.totalorder %s19, 1
        %s196 = scalar_select %p195, %s19, 1
        %s197 = smul.addr %s196, 8
        %s198 = scalar_lea.vmem %s0, %s197
        %p199 = pneg %p40
        %p200 = pneg %p37
        %p201 = pneg %p61
        %p202 = pneg %p58
        %p203 = pneg %p82
        %p204 = pneg %p79
        %p205 = pneg %p103
        %p206 = pneg %p100
        %p207 = pneg %p124
        %p208 = pneg %p121
        %p209 = pneg %p150
        %p210 = pneg %p147
        %s211 = sand.u32 %s137, 1
        %s212 = scalar_lea.sflag [#allocation3], %s211
        %s213 = sand.u32 %s137, 1
        %s214 = smul.addr %s213, 8
        %s215 = scalar_lea.vmem [#allocation2], %s214
        %p216 = scmp.lt.s32.totalorder %s19, 1
        %s217 = scalar_select %p216, %s19, 1
        %s218 = smul.addr %s217, 8
        %s219 = scalar_lea.vmem %s0, %s218
        %v220 = vld [vmem:[%s219] sm:$0xff]
        %v221 = vld [vmem:[%s1] sm:$0xff]
        %v222 = vld [vmem:[%s1 + $0x8] sm:$0xff]
        %v223 = vld [vmem:[%s1 + $0x10] sm:$0xff]
        %v224 = vld [vmem:[%s1 + $0x18] sm:$0xff]
        %v225 = vld [vmem:[%s2] sm:$0x1]
        %v227 = vlaneseq
        %v228 = vshrl.u32 %v227, 7
        %v229 = vsub.s32 0, %v228
        %v230 = vrot.slane %v225, %v229
        %vm232 = vcmask 261120
        %v234 = vsel %vm232, %v220, 0
        %236 = vmatprep.subr.mxu0 0.0
        %v237 = vand.u32 %v221, 4294901760
        %238 = vmatpush1.msra.mxu0 %v237
        %239 = vmatprep.subr.mxu0 0.0
        %v240 = vand.u32 %v222, 4294901760
        %241 = vmatpush1.msra.mxu0 %v240
        %242 = vmatprep.subr.mxu0 0.0
        %v243 = vand.u32 %v223, 4294901760
        %244 = vmatpush1.msra.mxu0 %v243
        %245 = vmatprep.subr.mxu0 0.0
        %v246 = vand.u32 %v224, 4294901760
        %247 = vmatpush1.msra.mxu0 %v246
        %248 = vmatprep.subr.mxu0 0.0
        %249 = vmatpush1.msra.mxu0 0.0
        %250 = vmatprep.subr.mxu0 0.0
        %251 = vmatpush1.msra.mxu0 0.0
        %252 = vmatprep.subr.mxu0 0.0
        %253 = vmatpush1.msra.mxu0 0.0
        %254 = vmatprep.subr.mxu0 0.0
        %255 = vmatpush1.msra.mxu0 0.0
        %256 = vmatprep.subr.mxu0 0.0
        %257 = vmatpush1.msra.mxu0 0.0
        %258 = vmatprep.subr.mxu0 0.0
        %259 = vmatpush1.msra.mxu0 0.0
        %260 = vmatprep.subr.mxu0 0.0
        %261 = vmatpush1.msra.mxu0 0.0
        %262 = vmatprep.subr.mxu0 0.0
        %263 = vmatpush1.msra.mxu0 0.0
        %264 = vmatprep.subr.mxu0 0.0
        %265 = vmatpush1.msra.mxu0 0.0
        %266 = vmatprep.subr.mxu0 0.0
        %267 = vmatpush1.msra.mxu0 0.0
        %268 = vmatprep.subr.mxu0 0.0
        %269 = vmatpush1.msra.mxu0 0.0
        %270 = vmatprep.subr.mxu0 0.0
        %271 = vmatpush1.msra.mxu0 0.0
        %272 = vmatprep.subr.mxu0 0.0
        %273 = vmatpush1.msra.mxu0 0.0
        %274 = vmatprep.subr.mxu0 0.0
        %275 = vmatpush1.msra.mxu0 0.0
        %276 = vmatprep.subr.mxu0 0.0
        %277 = vmatpush1.msra.mxu0 0.0
        %278 = vmatprep.subr.mxu0 0.0
        %279 = vmatpush1.msra.mxu0 0.0
        %280 = vmatprep.subr.mxu0 0.0
        %281 = vmatpush1.msra.mxu0 0.0
        %282 = vmatprep.subr.mxu0 0.0
        %283 = vmatpush1.msra.mxu0 0.0
        %284 = vmatprep.subr.mxu0 0.0
        %285 = vmatpush1.msra.mxu0 0.0
        %286 = vmatprep.subr.mxu0 0.0
        %287 = vmatpush1.msra.mxu0 0.0
        %288 = vmatprep.subr.mxu0 0.0
        %289 = vmatpush1.msra.mxu0 0.0
        %290 = vmatprep.subr.mxu0 0.0
        %291 = vmatpush1.msra.mxu0 0.0
        %292 = vmatprep.subr.mxu0 0.0
        %293 = vmatpush1.msra.mxu0 0.0
        %294 = vmatprep.subr.mxu0 0.0
        %295 = vmatpush1.msra.mxu0 0.0
        %296 = vmatprep.subr.mxu0 0.0
        %297 = vmatpush1.msra.mxu0 0.0
        %298 = vmatprep.subr.mxu0 0.0
        %299 = vmatpush1.msra.mxu0 0.0
        %300 = vmatprep.subr.mxu0 0.0
        %301 = vmatpush1.msra.mxu0 0.0
        %302 = vmatprep.subr.mxu0 0.0
        %303 = vmatpush1.msra.mxu0 0.0
        %304 = vmatprep.mubr.f32.mxu0 0.0
        %v305 = vand.u32 %v234, 4294901760
        %v306 = vsub.f32 %v234, %v305
        %v307 = vand.u32 %v306, 4294901760
        %v308 = vsub.f32 %v306, %v307
        %v309 = vand.u32 %v308, 4294901760
        %310 = vmatmul.mubr.f32.gmra.mrb[0].mxu0 %v309
        %v311 = vpop.f32.mrb[0].mxu0
        %v312 = vadd.f32 %v230, %v311
        %v313 = vpop.f32.mrb[0].mxu0
        %314 = vdwg.mxu0
        %315 = vmatprep.subr.mxu0 0.0
        %v316 = vand.u32 %v221, 4294901760
        %v317 = vsub.f32 %v221, %v316
        %v318 = vand.u32 %v317, 4294901760
        %v319 = vsub.f32 %v317, %v318
        %v320 = vand.u32 %v319, 4294901760
        %321 = vmatpush1.msra.mxu0 %v320
        %322 = vmatprep.subr.mxu0 0.0
        %v323 = vand.u32 %v222, 4294901760
        %v324 = vsub.f32 %v222, %v323
        %v325 = vand.u32 %v324, 4294901760
        %v326 = vsub.f32 %v324, %v325
        %v327 = vand.u32 %v326, 4294901760
        %328 = vmatpush1.msra.mxu0 %v327
        %329 = vmatprep.subr.mxu0 0.0
        %v330 = vand.u32 %v223, 4294901760
        %v331 = vsub.f32 %v223, %v330
        %v332 = vand.u32 %v331, 4294901760
        %v333 = vsub.f32 %v331, %v332
        %v334 = vand.u32 %v333, 4294901760
        %335 = vmatpush1.msra.mxu0 %v334
        %336 = vmatprep.subr.mxu0 0.0
        %v337 = vand.u32 %v224, 4294901760
        %v338 = vsub.f32 %v224, %v337
        %v339 = vand.u32 %v338, 4294901760
        %v340 = vsub.f32 %v338, %v339
        %v341 = vand.u32 %v340, 4294901760
        %342 = vmatpush1.msra.mxu0 %v341
        %343 = vmatprep.subr.mxu0 0.0
        %344 = vmatpush1.msra.mxu0 0.0
        %345 = vmatprep.subr.mxu0 0.0
        %346 = vmatpush1.msra.mxu0 0.0
        %347 = vmatprep.subr.mxu0 0.0
        %348 = vmatpush1.msra.mxu0 0.0
        %349 = vmatprep.subr.mxu0 0.0
        %350 = vmatpush1.msra.mxu0 0.0
        %351 = vmatprep.subr.mxu0 0.0
        %352 = vmatpush1.msra.mxu0 0.0
        %353 = vmatprep.subr.mxu0 0.0
        %354 = vmatpush1.msra.mxu0 0.0
        %355 = vmatprep.subr.mxu0 0.0
        %356 = vmatpush1.msra.mxu0 0.0
        %357 = vmatprep.subr.mxu0 0.0
        %358 = vmatpush1.msra.mxu0 0.0
        %359 = vmatprep.subr.mxu0 0.0
        %360 = vmatpush1.msra.mxu0 0.0
        %361 = vmatprep.subr.mxu0 0.0
        %362 = vmatpush1.msra.mxu0 0.0
        %363 = vmatprep.subr.mxu0 0.0
        %364 = vmatpush1.msra.mxu0 0.0
        %365 = vmatprep.subr.mxu0 0.0
        %366 = vmatpush1.msra.mxu0 0.0
        %367 = vmatprep.subr.mxu0 0.0
        %368 = vmatpush1.msra.mxu0 0.0
        %369 = vmatprep.subr.mxu0 0.0
        %370 = vmatpush1.msra.mxu0 0.0
        %371 = vmatprep.subr.mxu0 0.0
        %372 = vmatpush1.msra.mxu0 0.0
        %373 = vmatprep.subr.mxu0 0.0
        %374 = vmatpush1.msra.mxu0 0.0
        %375 = vmatprep.subr.mxu0 0.0
        %376 = vmatpush1.msra.mxu0 0.0
        %377 = vmatprep.subr.mxu0 0.0
        %378 = vmatpush1.msra.mxu0 0.0
        %379 = vmatprep.subr.mxu0 0.0
        %380 = vmatpush1.msra.mxu0 0.0
        %381 = vmatprep.subr.mxu0 0.0
        %382 = vmatpush1.msra.mxu0 0.0
        %383 = vmatprep.subr.mxu0 0.0
        %384 = vmatpush1.msra.mxu0 0.0
        %385 = vmatprep.subr.mxu0 0.0
        %386 = vmatpush1.msra.mxu0 0.0
        %387 = vmatprep.subr.mxu0 0.0
        %388 = vmatpush1.msra.mxu0 0.0
        %389 = vmatprep.subr.mxu0 0.0
        %390 = vmatpush1.msra.mxu0 0.0
        %391 = vmatprep.subr.mxu0 0.0
        %392 = vmatpush1.msra.mxu0 0.0
        %393 = vmatprep.subr.mxu0 0.0
        %394 = vmatpush1.msra.mxu0 0.0
        %395 = vmatprep.subr.mxu0 0.0
        %396 = vmatpush1.msra.mxu0 0.0
        %397 = vmatprep.subr.mxu0 0.0
        %398 = vmatpush1.msra.mxu0 0.0
        %399 = vmatprep.mubr.f32.mxu0 0.0
        %v400 = vand.u32 %v234, 4294901760
        %401 = vmatmul.mubr.f32.gmra.mrb[0].mxu0 %v400
        %v402 = vpop.f32.mrb[0].mxu0
        %v403 = vadd.f32 %v312, %v402
        %v404 = vpop.f32.mrb[0].mxu0
        %405 = vdwg.mxu0
        %406 = vmatprep.subr.mxu0 0.0
        %v407 = vand.u32 %v221, 4294901760
        %v408 = vsub.f32 %v221, %v407
        %409 = vmatpush1.msra.mxu0 %v408
        %410 = vmatprep.subr.mxu0 0.0
        %v411 = vand.u32 %v222, 4294901760
        %v412 = vsub.f32 %v222, %v411
        %413 = vmatpush1.msra.mxu0 %v412
        %414 = vmatprep.subr.mxu0 0.0
        %v415 = vand.u32 %v223, 4294901760
        %v416 = vsub.f32 %v223, %v415
        %417 = vmatpush1.msra.mxu0 %v416
        %418 = vmatprep.subr.mxu0 0.0
        %v419 = vand.u32 %v224, 4294901760
        %v420 = vsub.f32 %v224, %v419
        %421 = vmatpush1.msra.mxu0 %v420
        %422 = vmatprep.subr.mxu0 0.0
        %423 = vmatpush1.msra.mxu0 0.0
        %424 = vmatprep.subr.mxu0 0.0
        %425 = vmatpush1.msra.mxu0 0.0
        %426 = vmatprep.subr.mxu0 0.0
        %427 = vmatpush1.msra.mxu0 0.0
        %428 = vmatprep.subr.mxu0 0.0
        %429 = vmatpush1.msra.mxu0 0.0
        %430 = vmatprep.subr.mxu0 0.0
        %431 = vmatpush1.msra.mxu0 0.0
        %432 = vmatprep.subr.mxu0 0.0
        %433 = vmatpush1.msra.mxu0 0.0
        %434 = vmatprep.subr.mxu0 0.0
        %435 = vmatpush1.msra.mxu0 0.0
        %436 = vmatprep.subr.mxu0 0.0
        %437 = vmatpush1.msra.mxu0 0.0
        %438 = vmatprep.subr.mxu0 0.0
        %439 = vmatpush1.msra.mxu0 0.0
        %440 = vmatprep.subr.mxu0 0.0
        %441 = vmatpush1.msra.mxu0 0.0
        %442 = vmatprep.subr.mxu0 0.0
        %443 = vmatpush1.msra.mxu0 0.0
        %444 = vmatprep.subr.mxu0 0.0
        %445 = vmatpush1.msra.mxu0 0.0
        %446 = vmatprep.subr.mxu0 0.0
        %447 = vmatpush1.msra.mxu0 0.0
        %448 = vmatprep.subr.mxu0 0.0
        %449 = vmatpush1.msra.mxu0 0.0
        %450 = vmatprep.subr.mxu0 0.0
        %451 = vmatpush1.msra.mxu0 0.0
        %452 = vmatprep.subr.mxu0 0.0
        %453 = vmatpush1.msra.mxu0 0.0
        %454 = vmatprep.subr.mxu0 0.0
        %455 = vmatpush1.msra.mxu0 0.0
        %456 = vmatprep.subr.mxu0 0.0
        %457 = vmatpush1.msra.mxu0 0.0
        %458 = vmatprep.subr.mxu0 0.0
        %459 = vmatpush1.msra.mxu0 0.0
        %460 = vmatprep.subr.mxu0 0.0
        %461 = vmatpush1.msra.mxu0 0.0
        %462 = vmatprep.subr.mxu0 0.0
        %463 = vmatpush1.msra.mxu0 0.0
        %464 = vmatprep.subr.mxu0 0.0
        %465 = vmatpush1.msra.mxu0 0.0
        %466 = vmatprep.subr.mxu0 0.0
        %467 = vmatpush1.msra.mxu0 0.0
        %468 = vmatprep.subr.mxu0 0.0
        %469 = vmatpush1.msra.mxu0 0.0
        %470 = vmatprep.subr.mxu0 0.0
        %471 = vmatpush1.msra.mxu0 0.0
        %472 = vmatprep.subr.mxu0 0.0
        %473 = vmatpush1.msra.mxu0 0.0
        %474 = vmatprep.subr.mxu0 0.0
        %475 = vmatpush1.msra.mxu0 0.0
        %476 = vmatprep.subr.mxu0 0.0
        %477 = vmatpush1.msra.mxu0 0.0
        %478 = vmatprep.mubr.f32.mxu0 0.0
        %v479 = vand.u32 %v234, 4294901760
        %v480 = vsub.f32 %v234, %v479
        %481 = vmatmul.mubr.f32.gmra.mrb[0].mxu0 %v480
        %v482 = vpop.f32.mrb[0].mxu0
        %v483 = vadd.f32 %v403, %v482
        %v484 = vpop.f32.mrb[0].mxu0
        %485 = vdwg.mxu0
        %486 = vmatprep.subr.mxu0 0.0
        %v487 = vand.u32 %v221, 4294901760
        %488 = vmatpush1.msra.mxu0 %v487
        %489 = vmatprep.subr.mxu0 0.0
        %v490 = vand.u32 %v222, 4294901760
        %491 = vmatpush1.msra.mxu0 %v490
        %492 = vmatprep.subr.mxu0 0.0
        %v493 = vand.u32 %v223, 4294901760
        %494 = vmatpush1.msra.mxu0 %v493
        %495 = vmatprep.subr.mxu0 0.0
        %v496 = vand.u32 %v224, 4294901760
        %497 = vmatpush1.msra.mxu0 %v496
        %498 = vmatprep.subr.mxu0 0.0
        %499 = vmatpush1.msra.mxu0 0.0
        %500 = vmatprep.subr.mxu0 0.0
        %501 = vmatpush1.msra.mxu0 0.0
        %502 = vmatprep.subr.mxu0 0.0
        %503 = vmatpush1.msra.mxu0 0.0
        %504 = vmatprep.subr.mxu0 0.0
        %505 = vmatpush1.msra.mxu0 0.0
        %506 = vmatprep.subr.mxu0 0.0
        %507 = vmatpush1.msra.mxu0 0.0
        %508 = vmatprep.subr.mxu0 0.0
        %509 = vmatpush1.msra.mxu0 0.0
        %510 = vmatprep.subr.mxu0 0.0
        %511 = vmatpush1.msra.mxu0 0.0
        %512 = vmatprep.subr.mxu0 0.0
        %513 = vmatpush1.msra.mxu0 0.0
        %514 = vmatprep.subr.mxu0 0.0
        %515 = vmatpush1.msra.mxu0 0.0
        %516 = vmatprep.subr.mxu0 0.0
        %517 = vmatpush1.msra.mxu0 0.0
        %518 = vmatprep.subr.mxu0 0.0
        %519 = vmatpush1.msra.mxu0 0.0
        %520 = vmatprep.subr.mxu0 0.0
        %521 = vmatpush1.msra.mxu0 0.0
        %522 = vmatprep.subr.mxu0 0.0
        %523 = vmatpush1.msra.mxu0 0.0
        %524 = vmatprep.subr.mxu0 0.0
        %525 = vmatpush1.msra.mxu0 0.0
        %526 = vmatprep.subr.mxu0 0.0
        %527 = vmatpush1.msra.mxu0 0.0
        %528 = vmatprep.subr.mxu0 0.0
        %529 = vmatpush1.msra.mxu0 0.0
        %530 = vmatprep.subr.mxu0 0.0
        %531 = vmatpush1.msra.mxu0 0.0
        %532 = vmatprep.subr.mxu0 0.0
        %533 = vmatpush1.msra.mxu0 0.0
        %534 = vmatprep.subr.mxu0 0.0
        %535 = vmatpush1.msra.mxu0 0.0
        %536 = vmatprep.subr.mxu0 0.0
        %537 = vmatpush1.msra.mxu0 0.0
        %538 = vmatprep.subr.mxu0 0.0
        %539 = vmatpush1.msra.mxu0 0.0
        %540 = vmatprep.subr.mxu0 0.0
        %541 = vmatpush1.msra.mxu0 0.0
        %542 = vmatprep.subr.mxu0 0.0
        %543 = vmatpush1.msra.mxu0 0.0
        %544 = vmatprep.subr.mxu0 0.0
        %545 = vmatpush1.msra.mxu0 0.0
        %546 = vmatprep.subr.mxu0 0.0
        %547 = vmatpush1.msra.mxu0 0.0
        %548 = vmatprep.subr.mxu0 0.0
        %549 = vmatpush1.msra.mxu0 0.0
        %550 = vmatprep.subr.mxu0 0.0
        %551 = vmatpush1.msra.mxu0 0.0
        %552 = vmatprep.subr.mxu0 0.0
        %553 = vmatpush1.msra.mxu0 0.0
        %554 = vmatprep.mubr.f32.mxu0 0.0
        %v555 = vand.u32 %v234, 4294901760
        %v556 = vsub.f32 %v234, %v555
        %v557 = vand.u32 %v556, 4294901760
        %558 = vmatmul.mubr.f32.gmra.mrb[0].mxu0 %v557
        %v559 = vpop.f32.mrb[0].mxu0
        %v560 = vadd.f32 %v483, %v559
        %v561 = vpop.f32.mrb[0].mxu0
        %562 = vdwg.mxu0
        %563 = vmatprep.subr.mxu0 0.0
        %v564 = vand.u32 %v221, 4294901760
        %v565 = vsub.f32 %v221, %v564
        %v566 = vand.u32 %v565, 4294901760
        %567 = vmatpush1.msra.mxu0 %v566
        %568 = vmatprep.subr.mxu0 0.0
        %v569 = vand.u32 %v222, 4294901760
        %v570 = vsub.f32 %v222, %v569
        %v571 = vand.u32 %v570, 4294901760
        %572 = vmatpush1.msra.mxu0 %v571
        %573 = vmatprep.subr.mxu0 0.0
        %v574 = vand.u32 %v223, 4294901760
        %v575 = vsub.f32 %v223, %v574
        %v576 = vand.u32 %v575, 4294901760
        %577 = vmatpush1.msra.mxu0 %v576
        %578 = vmatprep.subr.mxu0 0.0
        %v579 = vand.u32 %v224, 4294901760
        %v580 = vsub.f32 %v224, %v579
        %v581 = vand.u32 %v580, 4294901760
        %582 = vmatpush1.msra.mxu0 %v581
        %583 = vmatprep.subr.mxu0 0.0
        %584 = vmatpush1.msra.mxu0 0.0
        %585 = vmatprep.subr.mxu0 0.0
        %586 = vmatpush1.msra.mxu0 0.0
        %587 = vmatprep.subr.mxu0 0.0
        %588 = vmatpush1.msra.mxu0 0.0
        %589 = vmatprep.subr.mxu0 0.0
        %590 = vmatpush1.msra.mxu0 0.0
        %591 = vmatprep.subr.mxu0 0.0
        %592 = vmatpush1.msra.mxu0 0.0
        %593 = vmatprep.subr.mxu0 0.0
        %594 = vmatpush1.msra.mxu0 0.0
        %595 = vmatprep.subr.mxu0 0.0
        %596 = vmatpush1.msra.mxu0 0.0
        %597 = vmatprep.subr.mxu0 0.0
        %598 = vmatpush1.msra.mxu0 0.0
        %599 = vmatprep.subr.mxu0 0.0
        %600 = vmatpush1.msra.mxu0 0.0
        %601 = vmatprep.subr.mxu0 0.0
        %602 = vmatpush1.msra.mxu0 0.0
        %603 = vmatprep.subr.mxu0 0.0
        %604 = vmatpush1.msra.mxu0 0.0
        %605 = vmatprep.subr.mxu0 0.0
        %606 = vmatpush1.msra.mxu0 0.0
        %607 = vmatprep.subr.mxu0 0.0
        %608 = vmatpush1.msra.mxu0 0.0
        %609 = vmatprep.subr.mxu0 0.0
        %610 = vmatpush1.msra.mxu0 0.0
        %611 = vmatprep.subr.mxu0 0.0
        %612 = vmatpush1.msra.mxu0 0.0
        %613 = vmatprep.subr.mxu0 0.0
        %614 = vmatpush1.msra.mxu0 0.0
        %615 = vmatprep.subr.mxu0 0.0
        %616 = vmatpush1.msra.mxu0 0.0
        %617 = vmatprep.subr.mxu0 0.0
        %618 = vmatpush1.msra.mxu0 0.0
        %619 = vmatprep.subr.mxu0 0.0
        %620 = vmatpush1.msra.mxu0 0.0
        %621 = vmatprep.subr.mxu0 0.0
        %622 = vmatpush1.msra.mxu0 0.0
        %623 = vmatprep.subr.mxu0 0.0
        %624 = vmatpush1.msra.mxu0 0.0
        %625 = vmatprep.subr.mxu0 0.0
        %626 = vmatpush1.msra.mxu0 0.0
        %627 = vmatprep.subr.mxu0 0.0
        %628 = vmatpush1.msra.mxu0 0.0
        %629 = vmatprep.subr.mxu0 0.0
        %630 = vmatpush1.msra.mxu0 0.0
        %631 = vmatprep.subr.mxu0 0.0
        %632 = vmatpush1.msra.mxu0 0.0
        %633 = vmatprep.subr.mxu0 0.0
        %634 = vmatpush1.msra.mxu0 0.0
        %635 = vmatprep.subr.mxu0 0.0
        %636 = vmatpush1.msra.mxu0 0.0
        %637 = vmatprep.subr.mxu0 0.0
        %638 = vmatpush1.msra.mxu0 0.0
        %639 = vmatprep.mubr.f32.mxu0 0.0
        %v640 = vand.u32 %v234, 4294901760
        %641 = vmatmul.mubr.f32.gmra.mrb[0].mxu0 %v640
        %v642 = vpop.f32.mrb[0].mxu0
        %v643 = vadd.f32 %v560, %v642
        %v644 = vpop.f32.mrb[0].mxu0
        %645 = vdwg.mxu0
        %646 = vmatprep.subr.mxu0 0.0
        %v647 = vand.u32 %v221, 4294901760
        %648 = vmatpush1.msra.mxu0 %v647
        %649 = vmatprep.subr.mxu0 0.0
        %v650 = vand.u32 %v222, 4294901760
        %651 = vmatpush1.msra.mxu0 %v650
        %652 = vmatprep.subr.mxu0 0.0
        %v653 = vand.u32 %v223, 4294901760
        %654 = vmatpush1.msra.mxu0 %v653
        %655 = vmatprep.subr.mxu0 0.0
        %v656 = vand.u32 %v224, 4294901760
        %657 = vmatpush1.msra.mxu0 %v656
        %658 = vmatprep.subr.mxu0 0.0
        %659 = vmatpush1.msra.mxu0 0.0
        %660 = vmatprep.subr.mxu0 0.0
        %661 = vmatpush1.msra.mxu0 0.0
        %662 = vmatprep.subr.mxu0 0.0
        %663 = vmatpush1.msra.mxu0 0.0
        %664 = vmatprep.subr.mxu0 0.0
        %665 = vmatpush1.msra.mxu0 0.0
        %666 = vmatprep.subr.mxu0 0.0
        %667 = vmatpush1.msra.mxu0 0.0
        %668 = vmatprep.subr.mxu0 0.0
        %669 = vmatpush1.msra.mxu0 0.0
        %670 = vmatprep.subr.mxu0 0.0
        %671 = vmatpush1.msra.mxu0 0.0
        %672 = vmatprep.subr.mxu0 0.0
        %673 = vmatpush1.msra.mxu0 0.0
        %674 = vmatprep.subr.mxu0 0.0
        %675 = vmatpush1.msra.mxu0 0.0
        %676 = vmatprep.subr.mxu0 0.0
        %677 = vmatpush1.msra.mxu0 0.0
        %678 = vmatprep.subr.mxu0 0.0
        %679 = vmatpush1.msra.mxu0 0.0
        %680 = vmatprep.subr.mxu0 0.0
        %681 = vmatpush1.msra.mxu0 0.0
        %682 = vmatprep.subr.mxu0 0.0
        %683 = vmatpush1.msra.mxu0 0.0
        %684 = vmatprep.subr.mxu0 0.0
        %685 = vmatpush1.msra.mxu0 0.0
        %686 = vmatprep.subr.mxu0 0.0
        %687 = vmatpush1.msra.mxu0 0.0
        %688 = vmatprep.subr.mxu0 0.0
        %689 = vmatpush1.msra.mxu0 0.0
        %690 = vmatprep.subr.mxu0 0.0
        %691 = vmatpush1.msra.mxu0 0.0
        %692 = vmatprep.subr.mxu0 0.0
        %693 = vmatpush1.msra.mxu0 0.0
        %694 = vmatprep.subr.mxu0 0.0
        %695 = vmatpush1.msra.mxu0 0.0
        %696 = vmatprep.subr.mxu0 0.0
        %697 = vmatpush1.msra.mxu0 0.0
        %698 = vmatprep.subr.mxu0 0.0
        %699 = vmatpush1.msra.mxu0 0.0
        %700 = vmatprep.subr.mxu0 0.0
        %701 = vmatpush1.msra.mxu0 0.0
        %702 = vmatprep.subr.mxu0 0.0
        %703 = vmatpush1.msra.mxu0 0.0
        %704 = vmatprep.subr.mxu0 0.0
        %705 = vmatpush1.msra.mxu0 0.0
        %706 = vmatprep.subr.mxu0 0.0
        %707 = vmatpush1.msra.mxu0 0.0
        %708 = vmatprep.subr.mxu0 0.0
        %709 = vmatpush1.msra.mxu0 0.0
        %710 = vmatprep.subr.mxu0 0.0
        %711 = vmatpush1.msra.mxu0 0.0
        %712 = vmatprep.subr.mxu0 0.0
        %713 = vmatpush1.msra.mxu0 0.0
        %714 = vmatprep.mubr.f32.mxu0 0.0
        %v715 = vand.u32 %v234, 4294901760
        %716 = vmatmul.mubr.f32.gmra.mrb[0].mxu0 %v715
        %v717 = vpop.f32.mrb[0].mxu0
        %v718 = vadd.f32 %v643, %v717
        %v719 = vpop.f32.mrb[0].mxu0
        %720 = vdwg.mxu0
        %v721 = vmul.f32 %v718, 0.5
        %v722 = vmul.f32 %v718, 0.70710677
        %v723 = verf.f32.pop %v722
        %v724 = vadd.f32 %v723, 1.0
        %v725 = vmul.f32 %v721, %v724
        %v726 = vld [vmem:[%s3] sm:$0xff]
        %v727 = vld [vmem:[%s3 + $0x8] sm:$0xff]
        %v728 = vld [vmem:[%s3 + $0x10] sm:$0xff]
        %v729 = vld [vmem:[%s3 + $0x18] sm:$0xff]
        %v730 = vld [vmem:[%s3 + $0x20] sm:$0xff]
        %v731 = vld [vmem:[%s3 + $0x28] sm:$0xff]
        %v732 = vld [vmem:[%s3 + $0x30] sm:$0xff]
        %v733 = vld [vmem:[%s3 + $0x38] sm:$0xff]
        %v734 = vld [vmem:[%s3 + $0x40] sm:$0xff]
        %v735 = vld [vmem:[%s3 + $0x48] sm:$0xff]
        %v736 = vld [vmem:[%s3 + $0x50] sm:$0xff]
        %v737 = vld [vmem:[%s3 + $0x58] sm:$0xff]
        %v738 = vld [vmem:[%s3 + $0x60] sm:$0xff]
        %v739 = vld [vmem:[%s3 + $0x68] sm:$0xff]
        %v740 = vld [vmem:[%s3 + $0x70] sm:$0xff]
        %v741 = vld [vmem:[%s3 + $0x78] sm:$0xff]
        %v742 = vld [vmem:[%s4] sm:$0x1]
        %v744 = vlaneseq
        %v745 = vshrl.u32 %v744, 7
        %v746 = vsub.s32 0, %v745
        %v747 = vrot.slane %v742, %v746
        %749 = vmatprep.subr.mxu0 0.0
        %v750 = vand.u32 %v726, 4294901760
        %751 = vmatpush1.msra.mxu0 %v750
        %752 = vmatprep.subr.mxu0 0.0
        %v753 = vand.u32 %v727, 4294901760
        %754 = vmatpush1.msra.mxu0 %v753
        %755 = vmatprep.subr.mxu0 0.0
        %v756 = vand.u32 %v728, 4294901760
        %757 = vmatpush1.msra.mxu0 %v756
        %758 = vmatprep.subr.mxu0 0.0
        %v759 = vand.u32 %v729, 4294901760
        %760 = vmatpush1.msra.mxu0 %v759
        %761 = vmatprep.subr.mxu0 0.0
        %v762 = vand.u32 %v730, 4294901760
        %763 = vmatpush1.msra.mxu0 %v762
        %764 = vmatprep.subr.mxu0 0.0
        %v765 = vand.u32 %v731, 4294901760
        %766 = vmatpush1.msra.mxu0 %v765
        %767 = vmatprep.subr.mxu0 0.0
        %v768 = vand.u32 %v732, 4294901760
        %769 = vmatpush1.msra.mxu0 %v768
        %770 = vmatprep.subr.mxu0 0.0
        %v771 = vand.u32 %v733, 4294901760
        %772 = vmatpush1.msra.mxu0 %v771
        %773 = vmatprep.subr.mxu0 0.0
        %v774 = vand.u32 %v734, 4294901760
        %775 = vmatpush1.msra.mxu0 %v774
        %776 = vmatprep.subr.mxu0 0.0
        %v777 = vand.u32 %v735, 4294901760
        %778 = vmatpush1.msra.mxu0 %v777
        %779 = vmatprep.subr.mxu0 0.0
        %v780 = vand.u32 %v736, 4294901760
        %781 = vmatpush1.msra.mxu0 %v780
        %782 = vmatprep.subr.mxu0 0.0
        %v783 = vand.u32 %v737, 4294901760
        %784 = vmatpush1.msra.mxu0 %v783
        %785 = vmatprep.subr.mxu0 0.0
        %v786 = vand.u32 %v738, 4294901760
        %787 = vmatpush1.msra.mxu0 %v786
        %788 = vmatprep.subr.mxu0 0.0
        %v789 = vand.u32 %v739, 4294901760
        %790 = vmatpush1.msra.mxu0 %v789
        %791 = vmatprep.subr.mxu0 0.0
        %v792 = vand.u32 %v740, 4294901760
        %793 = vmatpush1.msra.mxu0 %v792
        %794 = vmatprep.subr.mxu0 0.0
        %v795 = vand.u32 %v741, 4294901760
        %796 = vmatpush1.msra.mxu0 %v795
        %797 = vmatprep.subr.mxu0 0.0
        %798 = vmatpush1.msra.mxu0 0.0
        %799 = vmatprep.subr.mxu0 0.0
        %800 = vmatpush1.msra.mxu0 0.0
        %801 = vmatprep.subr.mxu0 0.0
        %802 = vmatpush1.msra.mxu0 0.0
        %803 = vmatprep.subr.mxu0 0.0
        %804 = vmatpush1.msra.mxu0 0.0
        %805 = vmatprep.subr.mxu0 0.0
        %806 = vmatpush1.msra.mxu0 0.0
        %807 = vmatprep.subr.mxu0 0.0
        %808 = vmatpush1.msra.mxu0 0.0
        %809 = vmatprep.subr.mxu0 0.0
        %810 = vmatpush1.msra.mxu0 0.0
        %811 = vmatprep.subr.mxu0 0.0
        %812 = vmatpush1.msra.mxu0 0.0
        %813 = vmatprep.subr.mxu0 0.0
        %814 = vmatpush1.msra.mxu0 0.0
        %815 = vmatprep.subr.mxu0 0.0
        %816 = vmatpush1.msra.mxu0 0.0
        %817 = vmatprep.subr.mxu0 0.0
        %818 = vmatpush1.msra.mxu0 0.0
        %819 = vmatprep.subr.mxu0 0.0
        %820 = vmatpush1.msra.mxu0 0.0
        %821 = vmatprep.subr.mxu0 0.0
        %822 = vmatpush1.msra.mxu0 0.0
        %823 = vmatprep.subr.mxu0 0.0
        %824 = vmatpush1.msra.mxu0 0.0
        %825 = vmatprep.subr.mxu0 0.0
        %826 = vmatpush1.msra.mxu0 0.0
        %827 = vmatprep.subr.mxu0 0.0
        %828 = vmatpush1.msra.mxu0 0.0
        %829 = vmatprep.mubr.f32.mxu0 0.0
        %v830 = vand.u32 %v725, 4294901760
        %v831 = vsub.f32 %v725, %v830
        %v832 = vand.u32 %v831, 4294901760
        %v833 = vsub.f32 %v831, %v832
        %v834 = vand.u32 %v833, 4294901760
        %835 = vmatmul.mubr.f32.gmra.mrb[0].mxu0 %v834
        %v836 = vpop.f32.mrb[0].mxu0
        %v837 = vadd.f32 %v747, %v836
        %v838 = vpop.f32.mrb[0].mxu0
        %839 = vdwg.mxu0
        %840 = vmatprep.subr.mxu0 0.0
        %v841 = vand.u32 %v726, 4294901760
        %v842 = vsub.f32 %v726, %v841
        %v843 = vand.u32 %v842, 4294901760
        %v844 = vsub.f32 %v842, %v843
        %v845 = vand.u32 %v844, 4294901760
        %846 = vmatpush1.msra.mxu0 %v845
        %847 = vmatprep.subr.mxu0 0.0
        %v848 = vand.u32 %v727, 4294901760
        %v849 = vsub.f32 %v727, %v848
        %v850 = vand.u32 %v849, 4294901760
        %v851 = vsub.f32 %v849, %v850
        %v852 = vand.u32 %v851, 4294901760
        %853 = vmatpush1.msra.mxu0 %v852
        %854 = vmatprep.subr.mxu0 0.0
        %v855 = vand.u32 %v728, 4294901760
        %v856 = vsub.f32 %v728, %v855
        %v857 = vand.u32 %v856, 4294901760
        %v858 = vsub.f32 %v856, %v857
        %v859 = vand.u32 %v858, 4294901760
        %860 = vmatpush1.msra.mxu0 %v859
        %861 = vmatprep.subr.mxu0 0.0
        %v862 = vand.u32 %v729, 4294901760
        %v863 = vsub.f32 %v729, %v862
        %v864 = vand.u32 %v863, 4294901760
        %v865 = vsub.f32 %v863, %v864
        %v866 = vand.u32 %v865, 4294901760
        %867 = vmatpush1.msra.mxu0 %v866
        %868 = vmatprep.subr.mxu0 0.0
        %v869 = vand.u32 %v730, 4294901760
        %v870 = vsub.f32 %v730, %v869
        %v871 = vand.u32 %v870, 4294901760
        %v872 = vsub.f32 %v870, %v871
        %v873 = vand.u32 %v872, 4294901760
        %874 = vmatpush1.msra.mxu0 %v873
        %875 = vmatprep.subr.mxu0 0.0
        %v876 = vand.u32 %v731, 4294901760
        %v877 = vsub.f32 %v731, %v876
        %v878 = vand.u32 %v877, 4294901760
        %v879 = vsub.f32 %v877, %v878
        %v880 = vand.u32 %v879, 4294901760
        %881 = vmatpush1.msra.mxu0 %v880
        %882 = vmatprep.subr.mxu0 0.0
        %v883 = vand.u32 %v732, 4294901760
        %v884 = vsub.f32 %v732, %v883
        %v885 = vand.u32 %v884, 4294901760
        %v886 = vsub.f32 %v884, %v885
        %v887 = vand.u32 %v886, 4294901760
        %888 = vmatpush1.msra.mxu0 %v887
        %889 = vmatprep.subr.mxu0 0.0
        %v890 = vand.u32 %v733, 4294901760
        %v891 = vsub.f32 %v733, %v890
        %v892 = vand.u32 %v891, 4294901760
        %v893 = vsub.f32 %v891, %v892
        %v894 = vand.u32 %v893, 4294901760
        %895 = vmatpush1.msra.mxu0 %v894
        %896 = vmatprep.subr.mxu0 0.0
        %v897 = vand.u32 %v734, 4294901760
        %v898 = vsub.f32 %v734, %v897
        %v899 = vand.u32 %v898, 4294901760
        %v900 = vsub.f32 %v898, %v899
        %v901 = vand.u32 %v900, 4294901760
        %902 = vmatpush1.msra.mxu0 %v901
        %903 = vmatprep.subr.mxu0 0.0
        %v904 = vand.u32 %v735, 4294901760
        %v905 = vsub.f32 %v735, %v904
        %v906 = vand.u32 %v905, 4294901760
        %v907 = vsub.f32 %v905, %v906
        %v908 = vand.u32 %v907, 4294901760
        %909 = vmatpush1.msra.mxu0 %v908
        %910 = vmatprep.subr.mxu0 0.0
        %v911 = vand.u32 %v736, 4294901760
        %v912 = vsub.f32 %v736, %v911
        %v913 = vand.u32 %v912, 4294901760
        %v914 = vsub.f32 %v912, %v913
        %v915 = vand.u32 %v914, 4294901760
        %916 = vmatpush1.msra.mxu0 %v915
        %917 = vmatprep.subr.mxu0 0.0
        %v918 = vand.u32 %v737, 4294901760
        %v919 = vsub.f32 %v737, %v918
        %v920 = vand.u32 %v919, 4294901760
        %v921 = vsub.f32 %v919, %v920
        %v922 = vand.u32 %v921, 4294901760
        %923 = vmatpush1.msra.mxu0 %v922
        %924 = vmatprep.subr.mxu0 0.0
        %v925 = vand.u32 %v738, 4294901760
        %v926 = vsub.f32 %v738, %v925
        %v927 = vand.u32 %v926, 4294901760
        %v928 = vsub.f32 %v926, %v927
        %v929 = vand.u32 %v928, 4294901760
        %930 = vmatpush1.msra.mxu0 %v929
        %931 = vmatprep.subr.mxu0 0.0
        %v932 = vand.u32 %v739, 4294901760
        %v933 = vsub.f32 %v739, %v932
        %v934 = vand.u32 %v933, 4294901760
        %v935 = vsub.f32 %v933, %v934
        %v936 = vand.u32 %v935, 4294901760
        %937 = vmatpush1.msra.mxu0 %v936
        %938 = vmatprep.subr.mxu0 0.0
        %v939 = vand.u32 %v740, 4294901760
        %v940 = vsub.f32 %v740, %v939
        %v941 = vand.u32 %v940, 4294901760
        %v942 = vsub.f32 %v940, %v941
        %v943 = vand.u32 %v942, 4294901760
        %944 = vmatpush1.msra.mxu0 %v943
        %945 = vmatprep.subr.mxu0 0.0
        %v946 = vand.u32 %v741, 4294901760
        %v947 = vsub.f32 %v741, %v946
        %v948 = vand.u32 %v947, 4294901760
        %v949 = vsub.f32 %v947, %v948
        %v950 = vand.u32 %v949, 4294901760
        %951 = vmatpush1.msra.mxu0 %v950
        %952 = vmatprep.subr.mxu0 0.0
        %953 = vmatpush1.msra.mxu0 0.0
        %954 = vmatprep.subr.mxu0 0.0
        %955 = vmatpush1.msra.mxu0 0.0
        %956 = vmatprep.subr.mxu0 0.0
        %957 = vmatpush1.msra.mxu0 0.0
        %958 = vmatprep.subr.mxu0 0.0
        %959 = vmatpush1.msra.mxu0 0.0
        %960 = vmatprep.subr.mxu0 0.0
        %961 = vmatpush1.msra.mxu0 0.0
        %962 = vmatprep.subr.mxu0 0.0
        %963 = vmatpush1.msra.mxu0 0.0
        %964 = vmatprep.subr.mxu0 0.0
        %965 = vmatpush1.msra.mxu0 0.0
        %966 = vmatprep.subr.mxu0 0.0
        %967 = vmatpush1.msra.mxu0 0.0
        %968 = vmatprep.subr.mxu0 0.0
        %969 = vmatpush1.msra.mxu0 0.0
        %970 = vmatprep.subr.mxu0 0.0
        %971 = vmatpush1.msra.mxu0 0.0
        %972 = vmatprep.subr.mxu0 0.0
        %973 = vmatpush1.msra.mxu0 0.0
        %974 = vmatprep.subr.mxu0 0.0
        %975 = vmatpush1.msra.mxu0 0.0
        %976 = vmatprep.subr.mxu0 0.0
        %977 = vmatpush1.msra.mxu0 0.0
        %978 = vmatprep.subr.mxu0 0.0
        %979 = vmatpush1.msra.mxu0 0.0
        %980 = vmatprep.subr.mxu0 0.0
        %981 = vmatpush1.msra.mxu0 0.0
        %982 = vmatprep.subr.mxu0 0.0
        %983 = vmatpush1.msra.mxu0 0.0
        %984 = vmatprep.mubr.f32.mxu0 0.0
        %v985 = vand.u32 %v725, 4294901760
        %986 = vmatmul.mubr.f32.gmra.mrb[0].mxu0 %v985
        %v987 = vpop.f32.mrb[0].mxu0
        %v988 = vadd.f32 %v837, %v987
        %v989 = vpop.f32.mrb[0].mxu0
        %990 = vdwg.mxu0
        %991 = vmatprep.subr.mxu0 0.0
        %v992 = vand.u32 %v726, 4294901760
        %v993 = vsub.f32 %v726, %v992
        %994 = vmatpush1.msra.mxu0 %v993
        %995 = vmatprep.subr.mxu0 0.0
        %v996 = vand.u32 %v727, 4294901760
        %v997 = vsub.f32 %v727, %v996
        %998 = vmatpush1.msra.mxu0 %v997
        %999 = vmatprep.subr.mxu0 0.0
        %v1000 = vand.u32 %v728, 4294901760
        %v1001 = vsub.f32 %v728, %v1000
        %1002 = vmatpush1.msra.mxu0 %v1001
        %1003 = vmatprep.subr.mxu0 0.0
        %v1004 = vand.u32 %v729, 4294901760
        %v1005 = vsub.f32 %v729, %v1004
        %1006 = vmatpush1.msra.mxu0 %v1005
        %1007 = vmatprep.subr.mxu0 0.0
        %v1008 = vand.u32 %v730, 4294901760
        %v1009 = vsub.f32 %v730, %v1008
        %1010 = vmatpush1.msra.mxu0 %v1009
        %1011 = vmatprep.subr.mxu0 0.0
        %v1012 = vand.u32 %v731, 4294901760
        %v1013 = vsub.f32 %v731, %v1012
        %1014 = vmatpush1.msra.mxu0 %v1013
        %1015 = vmatprep.subr.mxu0 0.0
        %v1016 = vand.u32 %v732, 4294901760
        %v1017 = vsub.f32 %v732, %v1016
        %1018 = vmatpush1.msra.mxu0 %v1017
        %1019 = vmatprep.subr.mxu0 0.0
        %v1020 = vand.u32 %v733, 4294901760
        %v1021 = vsub.f32 %v733, %v1020
        %1022 = vmatpush1.msra.mxu0 %v1021
        %1023 = vmatprep.subr.mxu0 0.0
        %v1024 = vand.u32 %v734, 4294901760
        %v1025 = vsub.f32 %v734, %v1024
        %1026 = vmatpush1.msra.mxu0 %v1025
        %1027 = vmatprep.subr.mxu0 0.0
        %v1028 = vand.u32 %v735, 4294901760
        %v1029 = vsub.f32 %v735, %v1028
        %1030 = vmatpush1.msra.mxu0 %v1029
        %1031 = vmatprep.subr.mxu0 0.0
        %v1032 = vand.u32 %v736, 4294901760
        %v1033 = vsub.f32 %v736, %v1032
        %1034 = vmatpush1.msra.mxu0 %v1033
        %1035 = vmatprep.subr.mxu0 0.0
        %v1036 = vand.u32 %v737, 4294901760
        %v1037 = vsub.f32 %v737, %v1036
        %1038 = vmatpush1.msra.mxu0 %v1037
        %1039 = vmatprep.subr.mxu0 0.0
        %v1040 = vand.u32 %v738, 4294901760
        %v1041 = vsub.f32 %v738, %v1040
        %1042 = vmatpush1.msra.mxu0 %v1041
        %1043 = vmatprep.subr.mxu0 0.0
        %v1044 = vand.u32 %v739, 4294901760
        %v1045 = vsub.f32 %v739, %v1044
        %1046 = vmatpush1.msra.mxu0 %v1045
        %1047 = vmatprep.subr.mxu0 0.0
        %v1048 = vand.u32 %v740, 4294901760
        %v1049 = vsub.f32 %v740, %v1048
        %1050 = vmatpush1.msra.mxu0 %v1049
        %1051 = vmatprep.subr.mxu0 0.0
        %v1052 = vand.u32 %v741, 4294901760
        %v1053 = vsub.f32 %v741, %v1052
        %1054 = vmatpush1.msra.mxu0 %v1053
        %1055 = vmatprep.subr.mxu0 0.0
        %1056 = vmatpush1.msra.mxu0 0.0
        %1057 = vmatprep.subr.mxu0 0.0
        %1058 = vmatpush1.msra.mxu0 0.0
        %1059 = vmatprep.subr.mxu0 0.0
        %1060 = vmatpush1.msra.mxu0 0.0
        %1061 = vmatprep.subr.mxu0 0.0
        %1062 = vmatpush1.msra.mxu0 0.0
        %1063 = vmatprep.subr.mxu0 0.0
        %1064 = vmatpush1.msra.mxu0 0.0
        %1065 = vmatprep.subr.mxu0 0.0
        %1066 = vmatpush1.msra.mxu0 0.0
        %1067 = vmatprep.subr.mxu0 0.0
        %1068 = vmatpush1.msra.mxu0 0.0
        %1069 = vmatprep.subr.mxu0 0.0
        %1070 = vmatpush1.msra.mxu0 0.0
        %1071 = vmatprep.subr.mxu0 0.0
        %1072 = vmatpush1.msra.mxu0 0.0
        %1073 = vmatprep.subr.mxu0 0.0
        %1074 = vmatpush1.msra.mxu0 0.0
        %1075 = vmatprep.subr.mxu0 0.0
        %1076 = vmatpush1.msra.mxu0 0.0
        %1077 = vmatprep.subr.mxu0 0.0
        %1078 = vmatpush1.msra.mxu0 0.0
        %1079 = vmatprep.subr.mxu0 0.0
        %1080 = vmatpush1.msra.mxu0 0.0
        %1081 = vmatprep.subr.mxu0 0.0
        %1082 = vmatpush1.msra.mxu0 0.0
        %1083 = vmatprep.subr.mxu0 0.0
        %1084 = vmatpush1.msra.mxu0 0.0
        %1085 = vmatprep.subr.mxu0 0.0
        %1086 = vmatpush1.msra.mxu0 0.0
        %1087 = vmatprep.mubr.f32.mxu0 0.0
        %v1088 = vand.u32 %v725, 4294901760
        %v1089 = vsub.f32 %v725, %v1088
        %1090 = vmatmul.mubr.f32.gmra.mrb[0].mxu0 %v1089
        %v1091 = vpop.f32.mrb[0].mxu0
        %v1092 = vadd.f32 %v988, %v1091
        %v1093 = vpop.f32.mrb[0].mxu0
        %1094 = vdwg.mxu0
        %1095 = vmatprep.subr.mxu0 0.0
        %v1096 = vand.u32 %v726, 4294901760
        %1097 = vmatpush1.msra.mxu0 %v1096
        %1098 = vmatprep.subr.mxu0 0.0
        %v1099 = vand.u32 %v727, 4294901760
        %1100 = vmatpush1.msra.mxu0 %v1099
        %1101 = vmatprep.subr.mxu0 0.0
        %v1102 = vand.u32 %v728, 4294901760
        %1103 = vmatpush1.msra.mxu0 %v1102
        %1104 = vmatprep.subr.mxu0 0.0
        %v1105 = vand.u32 %v729, 4294901760
        %1106 = vmatpush1.msra.mxu0 %v1105
        %1107 = vmatprep.subr.mxu0 0.0
        %v1108 = vand.u32 %v730, 4294901760
        %1109 = vmatpush1.msra.mxu0 %v1108
        %1110 = vmatprep.subr.mxu0 0.0
        %v1111 = vand.u32 %v731, 4294901760
        %1112 = vmatpush1.msra.mxu0 %v1111
        %1113 = vmatprep.subr.mxu0 0.0
        %v1114 = vand.u32 %v732, 4294901760
        %1115 = vmatpush1.msra.mxu0 %v1114
        %1116 = vmatprep.subr.mxu0 0.0
        %v1117 = vand.u32 %v733, 4294901760
        %1118 = vmatpush1.msra.mxu0 %v1117
        %1119 = vmatprep.subr.mxu0 0.0
        %v1120 = vand.u32 %v734, 4294901760
        %1121 = vmatpush1.msra.mxu0 %v1120
        %1122 = vmatprep.subr.mxu0 0.0
        %v1123 = vand.u32 %v735, 4294901760
        %1124 = vmatpush1.msra.mxu0 %v1123
        %1125 = vmatprep.subr.mxu0 0.0
        %v1126 = vand.u32 %v736, 4294901760
        %1127 = vmatpush1.msra.mxu0 %v1126
        %1128 = vmatprep.subr.mxu0 0.0
        %v1129 = vand.u32 %v737, 4294901760
        %1130 = vmatpush1.msra.mxu0 %v1129
        %1131 = vmatprep.subr.mxu0 0.0
        %v1132 = vand.u32 %v738, 4294901760
        %1133 = vmatpush1.msra.mxu0 %v1132
        %1134 = vmatprep.subr.mxu0 0.0
        %v1135 = vand.u32 %v739, 4294901760
        %1136 = vmatpush1.msra.mxu0 %v1135
        %1137 = vmatprep.subr.mxu0 0.0
        %v1138 = vand.u32 %v740, 4294901760
        %1139 = vmatpush1.msra.mxu0 %v1138
        %1140 = vmatprep.subr.mxu0 0.0
        %v1141 = vand.u32 %v741, 4294901760
        %1142 = vmatpush1.msra.mxu0 %v1141
        %1143 = vmatprep.subr.mxu0 0.0
        %1144 = vmatpush1.msra.mxu0 0.0
        %1145 = vmatprep.subr.mxu0 0.0
        %1146 = vmatpush1.msra.mxu0 0.0
        %1147 = vmatprep.subr.mxu0 0.0
        %1148 = vmatpush1.msra.mxu0 0.0
        %1149 = vmatprep.subr.mxu0 0.0
        %1150 = vmatpush1.msra.mxu0 0.0
        %1151 = vmatprep.subr.mxu0 0.0
        %1152 = vmatpush1.msra.mxu0 0.0
        %1153 = vmatprep.subr.mxu0 0.0
        %1154 = vmatpush1.msra.mxu0 0.0
        %1155 = vmatprep.subr.mxu0 0.0
        %1156 = vmatpush1.msra.mxu0 0.0
        %1157 = vmatprep.subr.mxu0 0.0
        %1158 = vmatpush1.msra.mxu0 0.0
        %1159 = vmatprep.subr.mxu0 0.0
        %1160 = vmatpush1.msra.mxu0 0.0
        %1161 = vmatprep.subr.mxu0 0.0
        %1162 = vmatpush1.msra.mxu0 0.0
        %1163 = vmatprep.subr.mxu0 0.0
        %1164 = vmatpush1.msra.mxu0 0.0
        %1165 = vmatprep.subr.mxu0 0.0
        %1166 = vmatpush1.msra.mxu0 0.0
        %1167 = vmatprep.subr.mxu0 0.0
        %1168 = vmatpush1.msra.mxu0 0.0
        %1169 = vmatprep.subr.mxu0 0.0
        %1170 = vmatpush1.msra.mxu0 0.0
        %1171 = vmatprep.subr.mxu0 0.0
        %1172 = vmatpush1.msra.mxu0 0.0
        %1173 = vmatprep.subr.mxu0 0.0
        %1174 = vmatpush1.msra.mxu0 0.0
        %1175 = vmatprep.mubr.f32.mxu0 0.0
        %v1176 = vand.u32 %v725, 4294901760
        %v1177 = vsub.f32 %v725, %v1176
        %v1178 = vand.u32 %v1177, 4294901760
        %1179 = vmatmul.mubr.f32.gmra.mrb[0].mxu0 %v1178
        %v1180 = vpop.f32.mrb[0].mxu0
        %v1181 = vadd.f32 %v1092, %v1180
        %v1182 = vpop.f32.mrb[0].mxu0
        %1183 = vdwg.mxu0
        %1184 = vmatprep.subr.mxu0 0.0
        %v1185 = vand.u32 %v726, 4294901760
        %v1186 = vsub.f32 %v726, %v1185
        %v1187 = vand.u32 %v1186, 4294901760
        %1188 = vmatpush1.msra.mxu0 %v1187
        %1189 = vmatprep.subr.mxu0 0.0
        %v1190 = vand.u32 %v727, 4294901760
        %v1191 = vsub.f32 %v727, %v1190
        %v1192 = vand.u32 %v1191, 4294901760
        %1193 = vmatpush1.msra.mxu0 %v1192
        %1194 = vmatprep.subr.mxu0 0.0
        %v1195 = vand.u32 %v728, 4294901760
        %v1196 = vsub.f32 %v728, %v1195
        %v1197 = vand.u32 %v1196, 4294901760
        %1198 = vmatpush1.msra.mxu0 %v1197
        %1199 = vmatprep.subr.mxu0 0.0
        %v1200 = vand.u32 %v729, 4294901760
        %v1201 = vsub.f32 %v729, %v1200
        %v1202 = vand.u32 %v1201, 4294901760
        %1203 = vmatpush1.msra.mxu0 %v1202
        %1204 = vmatprep.subr.mxu0 0.0
        %v1205 = vand.u32 %v730, 4294901760
        %v1206 = vsub.f32 %v730, %v1205
        %v1207 = vand.u32 %v1206, 4294901760
        %1208 = vmatpush1.msra.mxu0 %v1207
        %1209 = vmatprep.subr.mxu0 0.0
        %v1210 = vand.u32 %v731, 4294901760
        %v1211 = vsub.f32 %v731, %v1210
        %v1212 = vand.u32 %v1211, 4294901760
        %1213 = vmatpush1.msra.mxu0 %v1212
        %1214 = vmatprep.subr.mxu0 0.0
        %v1215 = vand.u32 %v732, 4294901760
        %v1216 = vsub.f32 %v732, %v1215
        %v1217 = vand.u32 %v1216, 4294901760
        %1218 = vmatpush1.msra.mxu0 %v1217
        %1219 = vmatprep.subr.mxu0 0.0
        %v1220 = vand.u32 %v733, 4294901760
        %v1221 = vsub.f32 %v733, %v1220
        %v1222 = vand.u32 %v1221, 4294901760
        %1223 = vmatpush1.msra.mxu0 %v1222
        %1224 = vmatprep.subr.mxu0 0.0
        %v1225 = vand.u32 %v734, 4294901760
        %v1226 = vsub.f32 %v734, %v1225
        %v1227 = vand.u32 %v1226, 4294901760
        %1228 = vmatpush1.msra.mxu0 %v1227
        %1229 = vmatprep.subr.mxu0 0.0
        %v1230 = vand.u32 %v735, 4294901760
        %v1231 = vsub.f32 %v735, %v1230
        %v1232 = vand.u32 %v1231, 4294901760
        %1233 = vmatpush1.msra.mxu0 %v1232
        %1234 = vmatprep.subr.mxu0 0.0
        %v1235 = vand.u32 %v736, 4294901760
        %v1236 = vsub.f32 %v736, %v1235
        %v1237 = vand.u32 %v1236, 4294901760
        %1238 = vmatpush1.msra.mxu0 %v1237
        %1239 = vmatprep.subr.mxu0 0.0
        %v1240 = vand.u32 %v737, 4294901760
        %v1241 = vsub.f32 %v737, %v1240
        %v1242 = vand.u32 %v1241, 4294901760
        %1243 = vmatpush1.msra.mxu0 %v1242
        %1244 = vmatprep.subr.mxu0 0.0
        %v1245 = vand.u32 %v738, 4294901760
        %v1246 = vsub.f32 %v738, %v1245
        %v1247 = vand.u32 %v1246, 4294901760
        %1248 = vmatpush1.msra.mxu0 %v1247
        %1249 = vmatprep.subr.mxu0 0.0
        %v1250 = vand.u32 %v739, 4294901760
        %v1251 = vsub.f32 %v739, %v1250
        %v1252 = vand.u32 %v1251, 4294901760
        %1253 = vmatpush1.msra.mxu0 %v1252
        %1254 = vmatprep.subr.mxu0 0.0
        %v1255 = vand.u32 %v740, 4294901760
        %v1256 = vsub.f32 %v740, %v1255
        %v1257 = vand.u32 %v1256, 4294901760
        %1258 = vmatpush1.msra.mxu0 %v1257
        %1259 = vmatprep.subr.mxu0 0.0
        %v1260 = vand.u32 %v741, 4294901760
        %v1261 = vsub.f32 %v741, %v1260
        %v1262 = vand.u32 %v1261, 4294901760
        %1263 = vmatpush1.msra.mxu0 %v1262
        %1264 = vmatprep.subr.mxu0 0.0
        %1265 = vmatpush1.msra.mxu0 0.0
        %1266 = vmatprep.subr.mxu0 0.0
        %1267 = vmatpush1.msra.mxu0 0.0
        %1268 = vmatprep.subr.mxu0 0.0
        %1269 = vmatpush1.msra.mxu0 0.0
        %1270 = vmatprep.subr.mxu0 0.0
        %1271 = vmatpush1.msra.mxu0 0.0
        %1272 = vmatprep.subr.mxu0 0.0
        %1273 = vmatpush1.msra.mxu0 0.0
        %1274 = vmatprep.subr.mxu0 0.0
        %1275 = vmatpush1.msra.mxu0 0.0
        %1276 = vmatprep.subr.mxu0 0.0
        %1277 = vmatpush1.msra.mxu0 0.0
        %1278 = vmatprep.subr.mxu0 0.0
        %1279 = vmatpush1.msra.mxu0 0.0
        %1280 = vmatprep.subr.mxu0 0.0
        %1281 = vmatpush1.msra.mxu0 0.0
        %1282 = vmatprep.subr.mxu0 0.0
        %1283 = vmatpush1.msra.mxu0 0.0
        %1284 = vmatprep.subr.mxu0 0.0
        %1285 = vmatpush1.msra.mxu0 0.0
        %1286 = vmatprep.subr.mxu0 0.0
        %1287 = vmatpush1.msra.mxu0 0.0
        %1288 = vmatprep.subr.mxu0 0.0
        %1289 = vmatpush1.msra.mxu0 0.0
        %1290 = vmatprep.subr.mxu0 0.0
        %1291 = vmatpush1.msra.mxu0 0.0
        %1292 = vmatprep.subr.mxu0 0.0
        %1293 = vmatpush1.msra.mxu0 0.0
        %1294 = vmatprep.subr.mxu0 0.0
        %1295 = vmatpush1.msra.mxu0 0.0
        %1296 = vmatprep.mubr.f32.mxu0 0.0
        %v1297 = vand.u32 %v725, 4294901760
        %1298 = vmatmul.mubr.f32.gmra.mrb[0].mxu0 %v1297
        %v1299 = vpop.f32.mrb[0].mxu0
        %v1300 = vadd.f32 %v1181, %v1299
        %v1301 = vpop.f32.mrb[0].mxu0
        %1302 = vdwg.mxu0
        %1303 = vmatprep.subr.mxu0 0.0
        %v1304 = vand.u32 %v726, 4294901760
        %1305 = vmatpush1.msra.mxu0 %v1304
        %1306 = vmatprep.subr.mxu0 0.0
        %v1307 = vand.u32 %v727, 4294901760
        %1308 = vmatpush1.msra.mxu0 %v1307
        %1309 = vmatprep.subr.mxu0 0.0
        %v1310 = vand.u32 %v728, 4294901760
        %1311 = vmatpush1.msra.mxu0 %v1310
        %1312 = vmatprep.subr.mxu0 0.0
        %v1313 = vand.u32 %v729, 4294901760
        %1314 = vmatpush1.msra.mxu0 %v1313
        %1315 = vmatprep.subr.mxu0 0.0
        %v1316 = vand.u32 %v730, 4294901760
        %1317 = vmatpush1.msra.mxu0 %v1316
        %1318 = vmatprep.subr.mxu0 0.0
        %v1319 = vand.u32 %v731, 4294901760
        %1320 = vmatpush1.msra.mxu0 %v1319
        %1321 = vmatprep.subr.mxu0 0.0
        %v1322 = vand.u32 %v732, 4294901760
        %1323 = vmatpush1.msra.mxu0 %v1322
        %1324 = vmatprep.subr.mxu0 0.0
        %v1325 = vand.u32 %v733, 4294901760
        %1326 = vmatpush1.msra.mxu0 %v1325
        %1327 = vmatprep.subr.mxu0 0.0
        %v1328 = vand.u32 %v734, 4294901760
        %1329 = vmatpush1.msra.mxu0 %v1328
        %1330 = vmatprep.subr.mxu0 0.0
        %v1331 = vand.u32 %v735, 4294901760
        %1332 = vmatpush1.msra.mxu0 %v1331
        %1333 = vmatprep.subr.mxu0 0.0
        %v1334 = vand.u32 %v736, 4294901760
        %1335 = vmatpush1.msra.mxu0 %v1334
        %1336 = vmatprep.subr.mxu0 0.0
        %v1337 = vand.u32 %v737, 4294901760
        %1338 = vmatpush1.msra.mxu0 %v1337
        %1339 = vmatprep.subr.mxu0 0.0
        %v1340 = vand.u32 %v738, 4294901760
        %1341 = vmatpush1.msra.mxu0 %v1340
        %1342 = vmatprep.subr.mxu0 0.0
        %v1343 = vand.u32 %v739, 4294901760
        %1344 = vmatpush1.msra.mxu0 %v1343
        %1345 = vmatprep.subr.mxu0 0.0
        %v1346 = vand.u32 %v740, 4294901760
        %1347 = vmatpush1.msra.mxu0 %v1346
        %1348 = vmatprep.subr.mxu0 0.0
        %v1349 = vand.u32 %v741, 4294901760
        %1350 = vmatpush1.msra.mxu0 %v1349
        %1351 = vmatprep.subr.mxu0 0.0
        %1352 = vmatpush1.msra.mxu0 0.0
        %1353 = vmatprep.subr.mxu0 0.0
        %1354 = vmatpush1.msra.mxu0 0.0
        %1355 = vmatprep.subr.mxu0 0.0
        %1356 = vmatpush1.msra.mxu0 0.0
        %1357 = vmatprep.subr.mxu0 0.0
        %1358 = vmatpush1.msra.mxu0 0.0
        %1359 = vmatprep.subr.mxu0 0.0
        %1360 = vmatpush1.msra.mxu0 0.0
        %1361 = vmatprep.subr.mxu0 0.0
        %1362 = vmatpush1.msra.mxu0 0.0
        %1363 = vmatprep.subr.mxu0 0.0
        %1364 = vmatpush1.msra.mxu0 0.0
        %1365 = vmatprep.subr.mxu0 0.0
        %1366 = vmatpush1.msra.mxu0 0.0
        %1367 = vmatprep.subr.mxu0 0.0
        %1368 = vmatpush1.msra.mxu0 0.0
        %1369 = vmatprep.subr.mxu0 0.0
        %1370 = vmatpush1.msra.mxu0 0.0
        %1371 = vmatprep.subr.mxu0 0.0
        %1372 = vmatpush1.msra.mxu0 0.0
        %1373 = vmatprep.subr.mxu0 0.0
        %1374 = vmatpush1.msra.mxu0 0.0
        %1375 = vmatprep.subr.mxu0 0.0
        %1376 = vmatpush1.msra.mxu0 0.0
        %1377 = vmatprep.subr.mxu0 0.0
        %1378 = vmatpush1.msra.mxu0 0.0
        %1379 = vmatprep.subr.mxu0 0.0
        %1380 = vmatpush1.msra.mxu0 0.0
        %1381 = vmatprep.subr.mxu0 0.0
        %1382 = vmatpush1.msra.mxu0 0.0
        %1383 = vmatprep.mubr.f32.mxu0 0.0
        %v1384 = vand.u32 %v725, 4294901760
        %1385 = vmatmul.mubr.f32.gmra.mrb[0].mxu0 %v1384
        %v1386 = vpop.f32.mrb[0].mxu0
        %v1387 = vadd.f32 %v1300, %v1386
        %v1388 = vpop.f32.mrb[0].mxu0
        %1389 = vdwg.mxu0
        %1390 = vst.msk [vmem:[%s215] sm:$0xff] %vm232, %v1387
        %s1391 = sand.u32 %s137, 1
        %s1392 = scalar_lea.sflag [#allocation3], %s1391
        %s1393 = sand.u32 %s137, 1
        %s1394 = smul.addr %s1393, 8
        %s1395 = scalar_lea.vmem [#allocation2], %s1394
        // Predicated region
        $region41: #{tpu_custom_call.1} parent=39 // pred_check
          %p1396 = pneg %p147
        $region42: #{tpu_custom_call.1} parent=39 // pred_check_branch
          %1398 = sbr.rel (%p1396) target = $region44
        $region43: #{tpu_custom_call.1} parent=39 // pred_region
          %s1400 = ssub.s32 128, 128
          %1401 = vsyncadd %s1392, %s1400
          %s1402 = smul.addr %s19, 128
          %s1403 = scalar_lea.hbm %s5, %s1402
          %s1405 = sshll.u32 %s1395, 4
          %s1406 = int_to_ptr.vmem [resolvable:$true] %s1405
          %1408 = dma.vmem_to_hbm [thread:$0]  %s1406, 128, %s1403, %s1392
        $region44: #{tpu_custom_call.1} parent=39 // pred_fallthru
          _
      $region40: #{tpu_custom_call.1} parent=5 // pred_fallthru
        _
      %p1409 = scmp.le.s32.totalorder 2, %s14
      // Predicated region
      $region45: #{tpu_custom_call.1} parent=5 // pred_check
        %p1410 = pneg %p1409
      $region46: #{tpu_custom_call.1} parent=5 // pred_check_branch
        %1412 = sbr.rel (%p1410) target = $region48
      $region47: #{tpu_custom_call.1} parent=5 // pred_region
        %s1413 = ssub.s32 %s14, 2
        // Predicated region
        $region49: #{tpu_custom_call.1} parent=47 // pred_check
          %p1414 = pneg %p153
        $region50: #{tpu_custom_call.1} parent=47 // pred_check_branch
          %1416 = sbr.rel (%p1414) target = $region52
        $region51: #{tpu_custom_call.1} parent=47 // pred_region
          %s1417 = sand.u32 %s138, 1
          %s1418 = scalar_lea.sflag [#allocation3], %s1417
          %s1419 = sand.u32 %s138, 1
          %s1420 = smul.addr %s1419, 8
          %s1421 = scalar_lea.vmem [#allocation2], %s1420
          %1422 = dma.done %s1418, 128
        $region52: #{tpu_custom_call.1} parent=47 // pred_fallthru
          _
      $region48: #{tpu_custom_call.1} parent=5 // pred_fallthru
        _
    $region6: #{tpu_custom_call.1} parent=1 // loop_footer
      %s18 = sadd.s32 1, %s14
    $region7: #{tpu_custom_call.1} parent=1 // loop_footer_branch
      %13 = sbr.rel target = $region3
    $region8: #{tpu_custom_call.1} parent=1 // loop_exit
      _
    %1423 = vsyncpa [#allocation3], 1
    %s1424 = scalar_lea.sflag [#allocation3], 1
    %1425 = vsyncpa %s1424, 1

</llo_original>
